<compile_context>
chip_gen: v5e
topology: v5e:2x2
jax: 0.10.0
libtpu: 0.0.40
codegen_flags: <defaults>
</compile_context>

<pallas_src>
import functools
import math

import jax
import jax.numpy as jnp
from jax.experimental import pallas as pl
from jax.experimental.pallas import tpu as pltpu

LANE = 128      # lane width: last dims padded to this for lane-dense vregs/stores
SUBLANE = 8     # sublane width: batch padded to this for aligned row slices


def _round_up(n: int, m: int) -> int:
    return ((n + m - 1) // m) * m


def rnn_lm_kernel(seq_len, bs, bs_p,
                  ids_ref, proj_ref, h0_ref, whh_ref, wfc_ref, bfc_ref,
                  out_ref, hout_ref, hs_scr):
    """Whole sequence in one gridless kernel invocation.

    ids_ref : SMEM (seq_len, bs) int32   token ids
    proj_ref: VMEM (V_p, 1, H_p) f32     precomputed embed @ W_ih^T + (b_ih+b_hh)
    h0_ref  : VMEM (bs_p, H_p)  f32      initial hidden state (zero-padded)
    whh_ref : VMEM (H_p, H_p)   f32      W_hh^T (zero-padded)
    wfc_ref : VMEM (H_p, O_p)   f32      W_fc^T (zero-padded)
    bfc_ref : VMEM (1, O_p)     f32      fc bias (zero-padded)
    out_ref : VMEM (seq_len*bs_p, O_p)   logits for every (t, b)
    hout_ref: VMEM (bs_p, H_p)           final hidden state
    hs_scr  : VMEM (seq_len*bs_p, H_p)   first holds the gathered input
              contributions, then is overwritten in place with hidden states.
    """
    # ---- Phase 1: in-kernel embedding gather (token ids read from SMEM). ----
    # proj_ref already contains the input projection + fused biases, so each
    # gathered row is the complete per-(t, b) input contribution.
    if bs_p != bs:
        hs_scr[...] = jnp.zeros_like(hs_scr)      # padded batch rows stay zero
    for t in range(seq_len):
        for b in range(bs):
            r = t * bs_p + b
            hs_scr[r:r + 1, :] = proj_ref[ids_ref[t, b]]   # (1, H_p) row gather

    # ---- Phase 2: serial recurrence, fully unrolled (seq_len small, static). ----
    # W_hh streams from VMEM each step (per-step vld hides under MXU latency;
    # pinning it in vregs would cost 16+ vregs across every unrolled step).
    h = h0_ref[...]
    for t in range(seq_len):
        lo = t * bs_p
        xw = hs_scr[lo:lo + bs_p, :]                        # aligned (bs_p, H_p)
        h = jnp.tanh(xw + jnp.dot(h, whh_ref[...],
                                  preferred_element_type=jnp.float32))
        hs_scr[lo:lo + bs_p, :] = h                         # overwrite with h_t
    hout_ref[...] = h

    # ---- Phase 3: FC projection hoisted out of the recurrence. ----
    out_ref[...] = (
        jnp.dot(hs_scr[...], wfc_ref[...], preferred_element_type=jnp.float32)
        + bfc_ref[...]
    )


def prepare_kernel_params(params):
    """One-time parameter preparation (NOT per forward call).

    Folds Embedding + input projection + fused RNN biases into a single lookup
    table, pre-transposes W_hh / W_fc, casts everything to f32 and zero-pads all
    lane dims to 128 (and the vocab dim to a sublane multiple).
    """
    f32 = jnp.float32
    vocab, E = params["embed"].shape
    H = params["w_hh"].shape[0]
    O = params["w_fc"].shape[0]
    H_p, O_p = _round_up(H, LANE), _round_up(O, LANE)
    V_p = _round_up(vocab, SUBLANE)

    # proj[v, :] = embed[v, :] @ W_ih^T + (b_ih + b_hh)   (parameter-only algebra)
    proj = (params["embed"].astype(f32) @ params["w_ih"].T.astype(f32)
            + (params["b_ih"] + params["b_hh"]).astype(f32))           # (vocab, H)
    proj = jnp.pad(proj, ((0, V_p - vocab), (0, H_p - H)))
    proj = proj.reshape(V_p, 1, H_p)   # leading-dim layout -> cheap dynamic gather

    w_hh = jnp.pad(params["w_hh"].T.astype(f32), ((0, H_p - H), (0, H_p - H)))
    w_fc = jnp.pad(params["w_fc"].T.astype(f32), ((0, H_p - H), (0, O_p - O)))
    b_fc = jnp.pad(params["b_fc"].astype(f32).reshape(1, O), ((0, 0), (0, O_p - O)))

    return {
        "dims": (vocab, E, H, O, V_p, H_p, O_p),   # static Python ints
        "proj": proj, "w_hh": w_hh, "w_fc": w_fc, "b_fc": b_fc,
    }


def language_model_forward(x, kparams, h=None):
    """x: (seq_len, bs) int32 token ids.  Returns (out (seq_len*bs, O), h (1, bs, H))."""
    vocab, E, H, O, V_p, H_p, O_p = kparams["dims"]
    seq_len, bs = x.shape
    bs_p = _round_up(bs, SUBLANE)

    if h is None:
        h0 = jnp.zeros((bs_p, H_p), jnp.float32)
    else:
        h0 = h.reshape(bs, H).astype(jnp.float32)
        h0 = jnp.pad(h0, ((0, bs_p - bs), (0, H_p - H)))

    vmem = pl.BlockSpec(memory_space=pltpu.MemorySpace.VMEM)
    smem = pl.BlockSpec(memory_space=pltpu.MemorySpace.SMEM)
    kernel = functools.partial(rnn_lm_kernel, seq_len, bs, bs_p)

    out_p, h_final_p = pl.pallas_call(
        kernel,
        out_shape=(
            jax.ShapeDtypeStruct((seq_len * bs_p, O_p), jnp.float32),
            jax.ShapeDtypeStruct((bs_p, H_p), jnp.float32),
        ),
        in_specs=[smem, vmem, vmem, vmem, vmem, vmem],
        out_specs=(vmem, vmem),
        scratch_shapes=[pltpu.VMEM((seq_len * bs_p, H_p), jnp.float32)],
    )(x, kparams["proj"], h0, kparams["w_hh"], kparams["w_fc"], kparams["b_fc"])

    # Drop batch/lane padding; flatten to (seq_len*bs, O) (torch reshape order).
    out = out_p.reshape(seq_len, bs_p, O_p)[:, :bs, :O].reshape(seq_len * bs, O)
    h_final = h_final_p[:bs, :H].reshape(1, bs, H)            # num_layers = 1
    return out, h_final


def make_forward(params):
    """Prepare kernel params ONCE, return a jitted forward(x, h=None)."""
    kparams = prepare_kernel_params(params)

    def fwd(x, h=None):
        return language_model_forward(x, kparams, h)

    return jax.jit(fwd), kparams


def init_params(key, output_size, embedding_size, hidden_size):
    """Deterministic init mirroring PyTorch defaults (shapes match nn.Embedding/RNN/Linear)."""
    k = jax.random.split(key, 7)
    s = 1.0 / math.sqrt(hidden_size)
    return {
        "embed": jax.random.normal(k[0], (output_size, embedding_size), jnp.float32),
        "w_ih": jax.random.uniform(k[1], (hidden_size, embedding_size), jnp.float32, -s, s),
        "w_hh": jax.random.uniform(k[2], (hidden_size, hidden_size), jnp.float32, -s, s),
        "b_ih": jax.random.uniform(k[3], (hidden_size,), jnp.float32, -s, s),
        "b_hh": jax.random.uniform(k[4], (hidden_size,), jnp.float32, -s, s),
        "w_fc": jax.random.uniform(k[5], (output_size, hidden_size), jnp.float32, -s, s),
        "b_fc": jax.random.uniform(k[6], (output_size,), jnp.float32, -s, s),
    }


def reference_forward(x, params, h=None):
    """Pure-JAX reference of the PyTorch forward pass."""
    seq_len, bs = x.shape
    H = params["w_hh"].shape[0]
    embed_x = jnp.take(params["embed"], x, axis=0)
    h_t = jnp.zeros((bs, H), jnp.float32) if h is None else h.reshape(bs, H)
    outs = []
    for t in range(seq_len):
        h_t = jnp.tanh(embed_x[t] @ params["w_ih"].T + params["b_ih"]
                       + h_t @ params["w_hh"].T + params["b_hh"])
        outs.append(h_t)
    seq_x = jnp.stack(outs, axis=0)                           # (seq_len, bs, H)
    f_x = seq_x.reshape(seq_len * bs, H)
    res = f_x @ params["w_fc"].T + params["b_fc"]
    return res, h_t.reshape(1, bs, H)


if __name__ == "__main__":
    # Small shapes consistent with the module: vocab (output_size)=32, embed=16,
    # hidden=32, seq_len=8, batch=4, num_layers=1, seq_model='rnn'.
    output_size, embedding_size, hidden_size = 32, 16, 32
    seq_len, bs = 8, 4

    key = jax.random.PRNGKey(0)
    pkey, xkey = jax.random.split(key)
    params = init_params(pkey, output_size, embedding_size, hidden_size)
    x = jax.random.randint(xkey, (seq_len, bs), 0, output_size, dtype=jnp.int32)

    forward, _ = make_forward(params)

    # Fresh-sequence path (h = None).
    out, h_final = forward(x)
    jax.block_until_ready((out, h_final))

    ref_out, ref_h = reference_forward(x, params, h=None)
    assert out.shape == (seq_len * bs, output_size)
    assert h_final.shape == (1, bs, hidden_size)
    assert jnp.allclose(out, ref_out, atol=1e-4), "logits mismatch vs reference"
    assert jnp.allclose(h_final, ref_h, atol=1e-4), "hidden state mismatch vs reference"

    # Continuation path (feed the previous hidden state back in).
    out2, h_final2 = forward(x, h_final)
    jax.block_until_ready((out2, h_final2))
    ref_out2, ref_h2 = reference_forward(x, params, h=ref_h)
    assert jnp.allclose(out2, ref_out2, atol=1e-4), "logits mismatch (h path)"
    assert jnp.allclose(h_final2, ref_h2, atol=1e-4), "hidden mismatch (h path)"

    print("KERNEL_OK")
</pallas_src>

<mosaic_0001>
module attributes {stable_mosaic.version = 11 : i64} {
  func.func @rnn_lm_kernel(%arg0: memref<8x4xi32, #tpu.memory_space<smem>>, %arg1: memref<32x1x128xf32, #tpu.memory_space<vmem>>, %arg2: memref<8x128xf32, #tpu.memory_space<vmem>>, %arg3: memref<128x128xf32, #tpu.memory_space<vmem>>, %arg4: memref<128x128xf32, #tpu.memory_space<vmem>>, %arg5: memref<1x128xf32, #tpu.memory_space<vmem>>, %arg6: memref<64x128xf32, #tpu.memory_space<vmem>>, %arg7: memref<8x128xf32, #tpu.memory_space<vmem>>, %arg8: memref<64x128xf32, #tpu.memory_space<vmem>>) attributes {dimension_semantics = [], scalar_prefetch = 0 : i64, scratch_operands = 1 : i64, tpu.core_type = #tpu.core_type<tc>} {
    %cst = arith.constant 0.000000e+00 : f32
    %0 = vector.broadcast %cst : f32 to vector<64x128xf32>
    %c0 = arith.constant 0 : index
    %c0_0 = arith.constant 0 : index
    %1 = vector.load %arg8[%c0, %c0_0] : memref<64x128xf32, #tpu.memory_space<vmem>>, vector<64x128xf32>
    tpu.vector_store %arg8[%c0, %c0_0], %0 {strides = array<i32>} : memref<64x128xf32, #tpu.memory_space<vmem>>, vector<64x128xf32>,
    %c0_1 = arith.constant 0 : index
    %c0_2 = arith.constant 0 : index
    %2 = memref.load %arg0[%c0_1, %c0_2] : memref<8x4xi32, #tpu.memory_space<smem>>
    %3 = arith.index_cast %2 : i32 to index
    %c0_3 = arith.constant 0 : index
    %c0_4 = arith.constant 0 : index
    %4 = vector.load %arg1[%3, %c0_3, %c0_4] : memref<32x1x128xf32, #tpu.memory_space<vmem>>, vector<1x1x128xf32>
    %5 = vector.shape_cast %4 : vector<1x1x128xf32> to vector<1x128xf32>
    %c0_5 = arith.constant 0 : index
    %c0_6 = arith.constant 0 : index
    %6 = vector.load %arg8[%c0_5, %c0_6] : memref<64x128xf32, #tpu.memory_space<vmem>>, vector<1x128xf32>
    tpu.vector_store %arg8[%c0_5, %c0_6], %5 {strides = array<i32>} : memref<64x128xf32, #tpu.memory_space<vmem>>, vector<1x128xf32>,
    %c0_7 = arith.constant 0 : index
    %c1 = arith.constant 1 : index
    %7 = memref.load %arg0[%c0_7, %c1] : memref<8x4xi32, #tpu.memory_space<smem>>
    %8 = arith.index_cast %7 : i32 to index
    %c0_8 = arith.constant 0 : index
    %c0_9 = arith.constant 0 : index
    %9 = vector.load %arg1[%8, %c0_8, %c0_9] : memref<32x1x128xf32, #tpu.memory_space<vmem>>, vector<1x1x128xf32>
    %10 = vector.shape_cast %9 : vector<1x1x128xf32> to vector<1x128xf32>
    %c1_10 = arith.constant 1 : index
    %c0_11 = arith.constant 0 : index
    %11 = vector.load %arg8[%c1_10, %c0_11] : memref<64x128xf32, #tpu.memory_space<vmem>>, vector<1x128xf32>
    tpu.vector_store %arg8[%c1_10, %c0_11], %10 {strides = array<i32>} : memref<64x128xf32, #tpu.memory_space<vmem>>, vector<1x128xf32>,
    %c0_12 = arith.constant 0 : index
    %c2 = arith.constant 2 : index
    %12 = memref.load %arg0[%c0_12, %c2] : memref<8x4xi32, #tpu.memory_space<smem>>
    %13 = arith.index_cast %12 : i32 to index
    %c0_13 = arith.constant 0 : index
    %c0_14 = arith.constant 0 : index
    %14 = vector.load %arg1[%13, %c0_13, %c0_14] : memref<32x1x128xf32, #tpu.memory_space<vmem>>, vector<1x1x128xf32>
    %15 = vector.shape_cast %14 : vector<1x1x128xf32> to vector<1x128xf32>
    %c2_15 = arith.constant 2 : index
    %c0_16 = arith.constant 0 : index
    %16 = vector.load %arg8[%c2_15, %c0_16] : memref<64x128xf32, #tpu.memory_space<vmem>>, vector<1x128xf32>
    tpu.vector_store %arg8[%c2_15, %c0_16], %15 {strides = array<i32>} : memref<64x128xf32, #tpu.memory_space<vmem>>, vector<1x128xf32>,
    %c0_17 = arith.constant 0 : index
    %c3 = arith.constant 3 : index
    %17 = memref.load %arg0[%c0_17, %c3] : memref<8x4xi32, #tpu.memory_space<smem>>
    %18 = arith.index_cast %17 : i32 to index
    %c0_18 = arith.constant 0 : index
    %c0_19 = arith.constant 0 : index
    %19 = vector.load %arg1[%18, %c0_18, %c0_19] : memref<32x1x128xf32, #tpu.memory_space<vmem>>, vector<1x1x128xf32>
    %20 = vector.shape_cast %19 : vector<1x1x128xf32> to vector<1x128xf32>
    %c3_20 = arith.constant 3 : index
    %c0_21 = arith.constant 0 : index
    %21 = vector.load %arg8[%c3_20, %c0_21] : memref<64x128xf32, #tpu.memory_space<vmem>>, vector<1x128xf32>
    tpu.vector_store %arg8[%c3_20, %c0_21], %20 {strides = array<i32>} : memref<64x128xf32, #tpu.memory_space<vmem>>, vector<1x128xf32>,
    %c1_22 = arith.constant 1 : index
    %c0_23 = arith.constant 0 : index
    %22 = memref.load %arg0[%c1_22, %c0_23] : memref<8x4xi32, #tpu.memory_space<smem>>
    %23 = arith.index_cast %22 : i32 to index
    %c0_24 = arith.constant 0 : index
    %c0_25 = arith.constant 0 : index
    %24 = vector.load %arg1[%23, %c0_24, %c0_25] : memref<32x1x128xf32, #tpu.memory_space<vmem>>, vector<1x1x128xf32>
    %25 = vector.shape_cast %24 : vector<1x1x128xf32> to vector<1x128xf32>
    %c8 = arith.constant 8 : index
    %c0_26 = arith.constant 0 : index
    %26 = vector.load %arg8[%c8, %c0_26] : memref<64x128xf32, #tpu.memory_space<vmem>>, vector<1x128xf32>
    tpu.vector_store %arg8[%c8, %c0_26], %25 {strides = array<i32>} : memref<64x128xf32, #tpu.memory_space<vmem>>, vector<1x128xf32>,
    %c1_27 = arith.constant 1 : index
    %c1_28 = arith.constant 1 : index
    %27 = memref.load %arg0[%c1_27, %c1_28] : memref<8x4xi32, #tpu.memory_space<smem>>
    %28 = arith.index_cast %27 : i32 to index
    %c0_29 = arith.constant 0 : index
    %c0_30 = arith.constant 0 : index
    %29 = vector.load %arg1[%28, %c0_29, %c0_30] : memref<32x1x128xf32, #tpu.memory_space<vmem>>, vector<1x1x128xf32>
    %30 = vector.shape_cast %29 : vector<1x1x128xf32> to vector<1x128xf32>
    %c9 = arith.constant 9 : index
    %c0_31 = arith.constant 0 : index
    %31 = vector.load %arg8[%c9, %c0_31] : memref<64x128xf32, #tpu.memory_space<vmem>>, vector<1x128xf32>
    tpu.vector_store %arg8[%c9, %c0_31], %30 {strides = array<i32>} : memref<64x128xf32, #tpu.memory_space<vmem>>, vector<1x128xf32>,
    %c1_32 = arith.constant 1 : index
    %c2_33 = arith.constant 2 : index
    %32 = memref.load %arg0[%c1_32, %c2_33] : memref<8x4xi32, #tpu.memory_space<smem>>
    %33 = arith.index_cast %32 : i32 to index
    %c0_34 = arith.constant 0 : index
    %c0_35 = arith.constant 0 : index
    %34 = vector.load %arg1[%33, %c0_34, %c0_35] : memref<32x1x128xf32, #tpu.memory_space<vmem>>, vector<1x1x128xf32>
    %35 = vector.shape_cast %34 : vector<1x1x128xf32> to vector<1x128xf32>
    %c10 = arith.constant 10 : index
    %c0_36 = arith.constant 0 : index
    %36 = vector.load %arg8[%c10, %c0_36] : memref<64x128xf32, #tpu.memory_space<vmem>>, vector<1x128xf32>
    tpu.vector_store %arg8[%c10, %c0_36], %35 {strides = array<i32>} : memref<64x128xf32, #tpu.memory_space<vmem>>, vector<1x128xf32>,
    %c1_37 = arith.constant 1 : index
    %c3_38 = arith.constant 3 : index
    %37 = memref.load %arg0[%c1_37, %c3_38] : memref<8x4xi32, #tpu.memory_space<smem>>
    %38 = arith.index_cast %37 : i32 to index
    %c0_39 = arith.constant 0 : index
    %c0_40 = arith.constant 0 : index
    %39 = vector.load %arg1[%38, %c0_39, %c0_40] : memref<32x1x128xf32, #tpu.memory_space<vmem>>, vector<1x1x128xf32>
    %40 = vector.shape_cast %39 : vector<1x1x128xf32> to vector<1x128xf32>
    %c11 = arith.constant 11 : index
    %c0_41 = arith.constant 0 : index
    %41 = vector.load %arg8[%c11, %c0_41] : memref<64x128xf32, #tpu.memory_space<vmem>>, vector<1x128xf32>
    tpu.vector_store %arg8[%c11, %c0_41], %40 {strides = array<i32>} : memref<64x128xf32, #tpu.memory_space<vmem>>, vector<1x128xf32>,
    %c2_42 = arith.constant 2 : index
    %c0_43 = arith.constant 0 : index
    %42 = memref.load %arg0[%c2_42, %c0_43] : memref<8x4xi32, #tpu.memory_space<smem>>
    %43 = arith.index_cast %42 : i32 to index
    %c0_44 = arith.constant 0 : index
    %c0_45 = arith.constant 0 : index
    %44 = vector.load %arg1[%43, %c0_44, %c0_45] : memref<32x1x128xf32, #tpu.memory_space<vmem>>, vector<1x1x128xf32>
    %45 = vector.shape_cast %44 : vector<1x1x128xf32> to vector<1x128xf32>
    %c16 = arith.constant 16 : index
    %c0_46 = arith.constant 0 : index
    %46 = vector.load %arg8[%c16, %c0_46] : memref<64x128xf32, #tpu.memory_space<vmem>>, vector<1x128xf32>
    tpu.vector_store %arg8[%c16, %c0_46], %45 {strides = array<i32>} : memref<64x128xf32, #tpu.memory_space<vmem>>, vector<1x128xf32>,
    %c2_47 = arith.constant 2 : index
    %c1_48 = arith.constant 1 : index
    %47 = memref.load %arg0[%c2_47, %c1_48] : memref<8x4xi32, #tpu.memory_space<smem>>
    %48 = arith.index_cast %47 : i32 to index
    %c0_49 = arith.constant 0 : index
    %c0_50 = arith.constant 0 : index
    %49 = vector.load %arg1[%48, %c0_49, %c0_50] : memref<32x1x128xf32, #tpu.memory_space<vmem>>, vector<1x1x128xf32>
    %50 = vector.shape_cast %49 : vector<1x1x128xf32> to vector<1x128xf32>
    %c17 = arith.constant 17 : index
    %c0_51 = arith.constant 0 : index
    %51 = vector.load %arg8[%c17, %c0_51] : memref<64x128xf32, #tpu.memory_space<vmem>>, vector<1x128xf32>
    tpu.vector_store %arg8[%c17, %c0_51], %50 {strides = array<i32>} : memref<64x128xf32, #tpu.memory_space<vmem>>, vector<1x128xf32>,
    %c2_52 = arith.constant 2 : index
    %c2_53 = arith.constant 2 : index
    %52 = memref.load %arg0[%c2_52, %c2_53] : memref<8x4xi32, #tpu.memory_space<smem>>
    %53 = arith.index_cast %52 : i32 to index
    %c0_54 = arith.constant 0 : index
    %c0_55 = arith.constant 0 : index
    %54 = vector.load %arg1[%53, %c0_54, %c0_55] : memref<32x1x128xf32, #tpu.memory_space<vmem>>, vector<1x1x128xf32>
    %55 = vector.shape_cast %54 : vector<1x1x128xf32> to vector<1x128xf32>
    %c18 = arith.constant 18 : index
    %c0_56 = arith.constant 0 : index
    %56 = vector.load %arg8[%c18, %c0_56] : memref<64x128xf32, #tpu.memory_space<vmem>>, vector<1x128xf32>
    tpu.vector_store %arg8[%c18, %c0_56], %55 {strides = array<i32>} : memref<64x128xf32, #tpu.memory_space<vmem>>, vector<1x128xf32>,
    %c2_57 = arith.constant 2 : index
    %c3_58 = arith.constant 3 : index
    %57 = memref.load %arg0[%c2_57, %c3_58] : memref<8x4xi32, #tpu.memory_space<smem>>
    %58 = arith.index_cast %57 : i32 to index
    %c0_59 = arith.constant 0 : index
    %c0_60 = arith.constant 0 : index
    %59 = vector.load %arg1[%58, %c0_59, %c0_60] : memref<32x1x128xf32, #tpu.memory_space<vmem>>, vector<1x1x128xf32>
    %60 = vector.shape_cast %59 : vector<1x1x128xf32> to vector<1x128xf32>
    %c19 = arith.constant 19 : index
    %c0_61 = arith.constant 0 : index
    %61 = vector.load %arg8[%c19, %c0_61] : memref<64x128xf32, #tpu.memory_space<vmem>>, vector<1x128xf32>
    tpu.vector_store %arg8[%c19, %c0_61], %60 {strides = array<i32>} : memref<64x128xf32, #tpu.memory_space<vmem>>, vector<1x128xf32>,
    %c3_62 = arith.constant 3 : index
    %c0_63 = arith.constant 0 : index
    %62 = memref.load %arg0[%c3_62, %c0_63] : memref<8x4xi32, #tpu.memory_space<smem>>
    %63 = arith.index_cast %62 : i32 to index
    %c0_64 = arith.constant 0 : index
    %c0_65 = arith.constant 0 : index
    %64 = vector.load %arg1[%63, %c0_64, %c0_65] : memref<32x1x128xf32, #tpu.memory_space<vmem>>, vector<1x1x128xf32>
    %65 = vector.shape_cast %64 : vector<1x1x128xf32> to vector<1x128xf32>
    %c24 = arith.constant 24 : index
    %c0_66 = arith.constant 0 : index
    %66 = vector.load %arg8[%c24, %c0_66] : memref<64x128xf32, #tpu.memory_space<vmem>>, vector<1x128xf32>
    tpu.vector_store %arg8[%c24, %c0_66], %65 {strides = array<i32>} : memref<64x128xf32, #tpu.memory_space<vmem>>, vector<1x128xf32>,
    %c3_67 = arith.constant 3 : index
    %c1_68 = arith.constant 1 : index
    %67 = memref.load %arg0[%c3_67, %c1_68] : memref<8x4xi32, #tpu.memory_space<smem>>
    %68 = arith.index_cast %67 : i32 to index
    %c0_69 = arith.constant 0 : index
    %c0_70 = arith.constant 0 : index
    %69 = vector.load %arg1[%68, %c0_69, %c0_70] : memref<32x1x128xf32, #tpu.memory_space<vmem>>, vector<1x1x128xf32>
    %70 = vector.shape_cast %69 : vector<1x1x128xf32> to vector<1x128xf32>
    %c25 = arith.constant 25 : index
    %c0_71 = arith.constant 0 : index
    %71 = vector.load %arg8[%c25, %c0_71] : memref<64x128xf32, #tpu.memory_space<vmem>>, vector<1x128xf32>
    tpu.vector_store %arg8[%c25, %c0_71], %70 {strides = array<i32>} : memref<64x128xf32, #tpu.memory_space<vmem>>, vector<1x128xf32>,
    %c3_72 = arith.constant 3 : index
    %c2_73 = arith.constant 2 : index
    %72 = memref.load %arg0[%c3_72, %c2_73] : memref<8x4xi32, #tpu.memory_space<smem>>
    %73 = arith.index_cast %72 : i32 to index
    %c0_74 = arith.constant 0 : index
    %c0_75 = arith.constant 0 : index
    %74 = vector.load %arg1[%73, %c0_74, %c0_75] : memref<32x1x128xf32, #tpu.memory_space<vmem>>, vector<1x1x128xf32>
    %75 = vector.shape_cast %74 : vector<1x1x128xf32> to vector<1x128xf32>
    %c26 = arith.constant 26 : index
    %c0_76 = arith.constant 0 : index
    %76 = vector.load %arg8[%c26, %c0_76] : memref<64x128xf32, #tpu.memory_space<vmem>>, vector<1x128xf32>
    tpu.vector_store %arg8[%c26, %c0_76], %75 {strides = array<i32>} : memref<64x128xf32, #tpu.memory_space<vmem>>, vector<1x128xf32>,
    %c3_77 = arith.constant 3 : index
    %c3_78 = arith.constant 3 : index
    %77 = memref.load %arg0[%c3_77, %c3_78] : memref<8x4xi32, #tpu.memory_space<smem>>
    %78 = arith.index_cast %77 : i32 to index
    %c0_79 = arith.constant 0 : index
    %c0_80 = arith.constant 0 : index
    %79 = vector.load %arg1[%78, %c0_79, %c0_80] : memref<32x1x128xf32, #tpu.memory_space<vmem>>, vector<1x1x128xf32>
    %80 = vector.shape_cast %79 : vector<1x1x128xf32> to vector<1x128xf32>
    %c27 = arith.constant 27 : index
    %c0_81 = arith.constant 0 : index
    %81 = vector.load %arg8[%c27, %c0_81] : memref<64x128xf32, #tpu.memory_space<vmem>>, vector<1x128xf32>
    tpu.vector_store %arg8[%c27, %c0_81], %80 {strides = array<i32>} : memref<64x128xf32, #tpu.memory_space<vmem>>, vector<1x128xf32>,
    %c4 = arith.constant 4 : index
    %c0_82 = arith.constant 0 : index
    %82 = memref.load %arg0[%c4, %c0_82] : memref<8x4xi32, #tpu.memory_space<smem>>
    %83 = arith.index_cast %82 : i32 to index
    %c0_83 = arith.constant 0 : index
    %c0_84 = arith.constant 0 : index
    %84 = vector.load %arg1[%83, %c0_83, %c0_84] : memref<32x1x128xf32, #tpu.memory_space<vmem>>, vector<1x1x128xf32>
    %85 = vector.shape_cast %84 : vector<1x1x128xf32> to vector<1x128xf32>
    %c32 = arith.constant 32 : index
    %c0_85 = arith.constant 0 : index
    %86 = vector.load %arg8[%c32, %c0_85] : memref<64x128xf32, #tpu.memory_space<vmem>>, vector<1x128xf32>
    tpu.vector_store %arg8[%c32, %c0_85], %85 {strides = array<i32>} : memref<64x128xf32, #tpu.memory_space<vmem>>, vector<1x128xf32>,
    %c4_86 = arith.constant 4 : index
    %c1_87 = arith.constant 1 : index
    %87 = memref.load %arg0[%c4_86, %c1_87] : memref<8x4xi32, #tpu.memory_space<smem>>
    %88 = arith.index_cast %87 : i32 to index
    %c0_88 = arith.constant 0 : index
    %c0_89 = arith.constant 0 : index
    %89 = vector.load %arg1[%88, %c0_88, %c0_89] : memref<32x1x128xf32, #tpu.memory_space<vmem>>, vector<1x1x128xf32>
    %90 = vector.shape_cast %89 : vector<1x1x128xf32> to vector<1x128xf32>
    %c33 = arith.constant 33 : index
    %c0_90 = arith.constant 0 : index
    %91 = vector.load %arg8[%c33, %c0_90] : memref<64x128xf32, #tpu.memory_space<vmem>>, vector<1x128xf32>
    tpu.vector_store %arg8[%c33, %c0_90], %90 {strides = array<i32>} : memref<64x128xf32, #tpu.memory_space<vmem>>, vector<1x128xf32>,
    %c4_91 = arith.constant 4 : index
    %c2_92 = arith.constant 2 : index
    %92 = memref.load %arg0[%c4_91, %c2_92] : memref<8x4xi32, #tpu.memory_space<smem>>
    %93 = arith.index_cast %92 : i32 to index
    %c0_93 = arith.constant 0 : index
    %c0_94 = arith.constant 0 : index
    %94 = vector.load %arg1[%93, %c0_93, %c0_94] : memref<32x1x128xf32, #tpu.memory_space<vmem>>, vector<1x1x128xf32>
    %95 = vector.shape_cast %94 : vector<1x1x128xf32> to vector<1x128xf32>
    %c34 = arith.constant 34 : index
    %c0_95 = arith.constant 0 : index
    %96 = vector.load %arg8[%c34, %c0_95] : memref<64x128xf32, #tpu.memory_space<vmem>>, vector<1x128xf32>
    tpu.vector_store %arg8[%c34, %c0_95], %95 {strides = array<i32>} : memref<64x128xf32, #tpu.memory_space<vmem>>, vector<1x128xf32>,
    %c4_96 = arith.constant 4 : index
    %c3_97 = arith.constant 3 : index
    %97 = memref.load %arg0[%c4_96, %c3_97] : memref<8x4xi32, #tpu.memory_space<smem>>
    %98 = arith.index_cast %97 : i32 to index
    %c0_98 = arith.constant 0 : index
    %c0_99 = arith.constant 0 : index
    %99 = vector.load %arg1[%98, %c0_98, %c0_99] : memref<32x1x128xf32, #tpu.memory_space<vmem>>, vector<1x1x128xf32>
    %100 = vector.shape_cast %99 : vector<1x1x128xf32> to vector<1x128xf32>
    %c35 = arith.constant 35 : index
    %c0_100 = arith.constant 0 : index
    %101 = vector.load %arg8[%c35, %c0_100] : memref<64x128xf32, #tpu.memory_space<vmem>>, vector<1x128xf32>
    tpu.vector_store %arg8[%c35, %c0_100], %100 {strides = array<i32>} : memref<64x128xf32, #tpu.memory_space<vmem>>, vector<1x128xf32>,
    %c5 = arith.constant 5 : index
    %c0_101 = arith.constant 0 : index
    %102 = memref.load %arg0[%c5, %c0_101] : memref<8x4xi32, #tpu.memory_space<smem>>
    %103 = arith.index_cast %102 : i32 to index
    %c0_102 = arith.constant 0 : index
    %c0_103 = arith.constant 0 : index
    %104 = vector.load %arg1[%103, %c0_102, %c0_103] : memref<32x1x128xf32, #tpu.memory_space<vmem>>, vector<1x1x128xf32>
    %105 = vector.shape_cast %104 : vector<1x1x128xf32> to vector<1x128xf32>
    %c40 = arith.constant 40 : index
    %c0_104 = arith.constant 0 : index
    %106 = vector.load %arg8[%c40, %c0_104] : memref<64x128xf32, #tpu.memory_space<vmem>>, vector<1x128xf32>
    tpu.vector_store %arg8[%c40, %c0_104], %105 {strides = array<i32>} : memref<64x128xf32, #tpu.memory_space<vmem>>, vector<1x128xf32>,
    %c5_105 = arith.constant 5 : index
    %c1_106 = arith.constant 1 : index
    %107 = memref.load %arg0[%c5_105, %c1_106] : memref<8x4xi32, #tpu.memory_space<smem>>
    %108 = arith.index_cast %107 : i32 to index
    %c0_107 = arith.constant 0 : index
    %c0_108 = arith.constant 0 : index
    %109 = vector.load %arg1[%108, %c0_107, %c0_108] : memref<32x1x128xf32, #tpu.memory_space<vmem>>, vector<1x1x128xf32>
    %110 = vector.shape_cast %109 : vector<1x1x128xf32> to vector<1x128xf32>
    %c41 = arith.constant 41 : index
    %c0_109 = arith.constant 0 : index
    %111 = vector.load %arg8[%c41, %c0_109] : memref<64x128xf32, #tpu.memory_space<vmem>>, vector<1x128xf32>
    tpu.vector_store %arg8[%c41, %c0_109], %110 {strides = array<i32>} : memref<64x128xf32, #tpu.memory_space<vmem>>, vector<1x128xf32>,
    %c5_110 = arith.constant 5 : index
    %c2_111 = arith.constant 2 : index
    %112 = memref.load %arg0[%c5_110, %c2_111] : memref<8x4xi32, #tpu.memory_space<smem>>
    %113 = arith.index_cast %112 : i32 to index
    %c0_112 = arith.constant 0 : index
    %c0_113 = arith.constant 0 : index
    %114 = vector.load %arg1[%113, %c0_112, %c0_113] : memref<32x1x128xf32, #tpu.memory_space<vmem>>, vector<1x1x128xf32>
    %115 = vector.shape_cast %114 : vector<1x1x128xf32> to vector<1x128xf32>
    %c42 = arith.constant 42 : index
    %c0_114 = arith.constant 0 : index
    %116 = vector.load %arg8[%c42, %c0_114] : memref<64x128xf32, #tpu.memory_space<vmem>>, vector<1x128xf32>
    tpu.vector_store %arg8[%c42, %c0_114], %115 {strides = array<i32>} : memref<64x128xf32, #tpu.memory_space<vmem>>, vector<1x128xf32>,
    %c5_115 = arith.constant 5 : index
    %c3_116 = arith.constant 3 : index
    %117 = memref.load %arg0[%c5_115, %c3_116] : memref<8x4xi32, #tpu.memory_space<smem>>
    %118 = arith.index_cast %117 : i32 to index
    %c0_117 = arith.constant 0 : index
    %c0_118 = arith.constant 0 : index
    %119 = vector.load %arg1[%118, %c0_117, %c0_118] : memref<32x1x128xf32, #tpu.memory_space<vmem>>, vector<1x1x128xf32>
    %120 = vector.shape_cast %119 : vector<1x1x128xf32> to vector<1x128xf32>
    %c43 = arith.constant 43 : index
    %c0_119 = arith.constant 0 : index
    %121 = vector.load %arg8[%c43, %c0_119] : memref<64x128xf32, #tpu.memory_space<vmem>>, vector<1x128xf32>
    tpu.vector_store %arg8[%c43, %c0_119], %120 {strides = array<i32>} : memref<64x128xf32, #tpu.memory_space<vmem>>, vector<1x128xf32>,
    %c6 = arith.constant 6 : index
    %c0_120 = arith.constant 0 : index
    %122 = memref.load %arg0[%c6, %c0_120] : memref<8x4xi32, #tpu.memory_space<smem>>
    %123 = arith.index_cast %122 : i32 to index
    %c0_121 = arith.constant 0 : index
    %c0_122 = arith.constant 0 : index
    %124 = vector.load %arg1[%123, %c0_121, %c0_122] : memref<32x1x128xf32, #tpu.memory_space<vmem>>, vector<1x1x128xf32>
    %125 = vector.shape_cast %124 : vector<1x1x128xf32> to vector<1x128xf32>
    %c48 = arith.constant 48 : index
    %c0_123 = arith.constant 0 : index
    %126 = vector.load %arg8[%c48, %c0_123] : memref<64x128xf32, #tpu.memory_space<vmem>>, vector<1x128xf32>
    tpu.vector_store %arg8[%c48, %c0_123], %125 {strides = array<i32>} : memref<64x128xf32, #tpu.memory_space<vmem>>, vector<1x128xf32>,
    %c6_124 = arith.constant 6 : index
    %c1_125 = arith.constant 1 : index
    %127 = memref.load %arg0[%c6_124, %c1_125] : memref<8x4xi32, #tpu.memory_space<smem>>
    %128 = arith.index_cast %127 : i32 to index
    %c0_126 = arith.constant 0 : index
    %c0_127 = arith.constant 0 : index
    %129 = vector.load %arg1[%128, %c0_126, %c0_127] : memref<32x1x128xf32, #tpu.memory_space<vmem>>, vector<1x1x128xf32>
    %130 = vector.shape_cast %129 : vector<1x1x128xf32> to vector<1x128xf32>
    %c49 = arith.constant 49 : index
    %c0_128 = arith.constant 0 : index
    %131 = vector.load %arg8[%c49, %c0_128] : memref<64x128xf32, #tpu.memory_space<vmem>>, vector<1x128xf32>
    tpu.vector_store %arg8[%c49, %c0_128], %130 {strides = array<i32>} : memref<64x128xf32, #tpu.memory_space<vmem>>, vector<1x128xf32>,
    %c6_129 = arith.constant 6 : index
    %c2_130 = arith.constant 2 : index
    %132 = memref.load %arg0[%c6_129, %c2_130] : memref<8x4xi32, #tpu.memory_space<smem>>
    %133 = arith.index_cast %132 : i32 to index
    %c0_131 = arith.constant 0 : index
    %c0_132 = arith.constant 0 : index
    %134 = vector.load %arg1[%133, %c0_131, %c0_132] : memref<32x1x128xf32, #tpu.memory_space<vmem>>, vector<1x1x128xf32>
    %135 = vector.shape_cast %134 : vector<1x1x128xf32> to vector<1x128xf32>
    %c50 = arith.constant 50 : index
    %c0_133 = arith.constant 0 : index
    %136 = vector.load %arg8[%c50, %c0_133] : memref<64x128xf32, #tpu.memory_space<vmem>>, vector<1x128xf32>
    tpu.vector_store %arg8[%c50, %c0_133], %135 {strides = array<i32>} : memref<64x128xf32, #tpu.memory_space<vmem>>, vector<1x128xf32>,
    %c6_134 = arith.constant 6 : index
    %c3_135 = arith.constant 3 : index
    %137 = memref.load %arg0[%c6_134, %c3_135] : memref<8x4xi32, #tpu.memory_space<smem>>
    %138 = arith.index_cast %137 : i32 to index
    %c0_136 = arith.constant 0 : index
    %c0_137 = arith.constant 0 : index
    %139 = vector.load %arg1[%138, %c0_136, %c0_137] : memref<32x1x128xf32, #tpu.memory_space<vmem>>, vector<1x1x128xf32>
    %140 = vector.shape_cast %139 : vector<1x1x128xf32> to vector<1x128xf32>
    %c51 = arith.constant 51 : index
    %c0_138 = arith.constant 0 : index
    %141 = vector.load %arg8[%c51, %c0_138] : memref<64x128xf32, #tpu.memory_space<vmem>>, vector<1x128xf32>
    tpu.vector_store %arg8[%c51, %c0_138], %140 {strides = array<i32>} : memref<64x128xf32, #tpu.memory_space<vmem>>, vector<1x128xf32>,
    %c7 = arith.constant 7 : index
    %c0_139 = arith.constant 0 : index
    %142 = memref.load %arg0[%c7, %c0_139] : memref<8x4xi32, #tpu.memory_space<smem>>
    %143 = arith.index_cast %142 : i32 to index
    %c0_140 = arith.constant 0 : index
    %c0_141 = arith.constant 0 : index
    %144 = vector.load %arg1[%143, %c0_140, %c0_141] : memref<32x1x128xf32, #tpu.memory_space<vmem>>, vector<1x1x128xf32>
    %145 = vector.shape_cast %144 : vector<1x1x128xf32> to vector<1x128xf32>
    %c56 = arith.constant 56 : index
    %c0_142 = arith.constant 0 : index
    %146 = vector.load %arg8[%c56, %c0_142] : memref<64x128xf32, #tpu.memory_space<vmem>>, vector<1x128xf32>
    tpu.vector_store %arg8[%c56, %c0_142], %145 {strides = array<i32>} : memref<64x128xf32, #tpu.memory_space<vmem>>, vector<1x128xf32>,
    %c7_143 = arith.constant 7 : index
    %c1_144 = arith.constant 1 : index
    %147 = memref.load %arg0[%c7_143, %c1_144] : memref<8x4xi32, #tpu.memory_space<smem>>
    %148 = arith.index_cast %147 : i32 to index
    %c0_145 = arith.constant 0 : index
    %c0_146 = arith.constant 0 : index
    %149 = vector.load %arg1[%148, %c0_145, %c0_146] : memref<32x1x128xf32, #tpu.memory_space<vmem>>, vector<1x1x128xf32>
    %150 = vector.shape_cast %149 : vector<1x1x128xf32> to vector<1x128xf32>
    %c57 = arith.constant 57 : index
    %c0_147 = arith.constant 0 : index
    %151 = vector.load %arg8[%c57, %c0_147] : memref<64x128xf32, #tpu.memory_space<vmem>>, vector<1x128xf32>
    tpu.vector_store %arg8[%c57, %c0_147], %150 {strides = array<i32>} : memref<64x128xf32, #tpu.memory_space<vmem>>, vector<1x128xf32>,
    %c7_148 = arith.constant 7 : index
    %c2_149 = arith.constant 2 : index
    %152 = memref.load %arg0[%c7_148, %c2_149] : memref<8x4xi32, #tpu.memory_space<smem>>
    %153 = arith.index_cast %152 : i32 to index
    %c0_150 = arith.constant 0 : index
    %c0_151 = arith.constant 0 : index
    %154 = vector.load %arg1[%153, %c0_150, %c0_151] : memref<32x1x128xf32, #tpu.memory_space<vmem>>, vector<1x1x128xf32>
    %155 = vector.shape_cast %154 : vector<1x1x128xf32> to vector<1x128xf32>
    %c58 = arith.constant 58 : index
    %c0_152 = arith.constant 0 : index
    %156 = vector.load %arg8[%c58, %c0_152] : memref<64x128xf32, #tpu.memory_space<vmem>>, vector<1x128xf32>
    tpu.vector_store %arg8[%c58, %c0_152], %155 {strides = array<i32>} : memref<64x128xf32, #tpu.memory_space<vmem>>, vector<1x128xf32>,
    %c7_153 = arith.constant 7 : index
    %c3_154 = arith.constant 3 : index
    %157 = memref.load %arg0[%c7_153, %c3_154] : memref<8x4xi32, #tpu.memory_space<smem>>
    %158 = arith.index_cast %157 : i32 to index
    %c0_155 = arith.constant 0 : index
    %c0_156 = arith.constant 0 : index
    %159 = vector.load %arg1[%158, %c0_155, %c0_156] : memref<32x1x128xf32, #tpu.memory_space<vmem>>, vector<1x1x128xf32>
    %160 = vector.shape_cast %159 : vector<1x1x128xf32> to vector<1x128xf32>
    %c59 = arith.constant 59 : index
    %c0_157 = arith.constant 0 : index
    %161 = vector.load %arg8[%c59, %c0_157] : memref<64x128xf32, #tpu.memory_space<vmem>>, vector<1x128xf32>
    tpu.vector_store %arg8[%c59, %c0_157], %160 {strides = array<i32>} : memref<64x128xf32, #tpu.memory_space<vmem>>, vector<1x128xf32>,
    %c0_158 = arith.constant 0 : index
    %c0_159 = arith.constant 0 : index
    %162 = vector.load %arg2[%c0_158, %c0_159] : memref<8x128xf32, #tpu.memory_space<vmem>>, vector<8x128xf32>
    %c0_160 = arith.constant 0 : index
    %c0_161 = arith.constant 0 : index
    %163 = vector.load %arg8[%c0_160, %c0_161] : memref<64x128xf32, #tpu.memory_space<vmem>>, vector<8x128xf32>
    %c0_162 = arith.constant 0 : index
    %c0_163 = arith.constant 0 : index
    %164 = vector.load %arg3[%c0_162, %c0_163] : memref<128x128xf32, #tpu.memory_space<vmem>>, vector<128x128xf32>
    %cst_164 = arith.constant dense<0.000000e+00> : vector<8x128xf32>
    %165 = tpu.matmul %162, %164, %cst_164 {dimension_numbers = #tpu.dot_dimension_numbers<[1], [0], [0], [1], [0, 0, 1, 1], [], []>} : vector<8x128xf32>, vector<128x128xf32>, vector<8x128xf32> -> vector<8x128xf32>
    %166 = arith.addf %163, %165 : vector<8x128xf32>
    %167 = math.tanh %166 : vector<8x128xf32>
    %c0_165 = arith.constant 0 : index
    %c0_166 = arith.constant 0 : index
    %168 = vector.load %arg8[%c0_165, %c0_166] : memref<64x128xf32, #tpu.memory_space<vmem>>, vector<8x128xf32>
    tpu.vector_store %arg8[%c0_165, %c0_166], %167 {strides = array<i32>} : memref<64x128xf32, #tpu.memory_space<vmem>>, vector<8x128xf32>,
    %c8_167 = arith.constant 8 : index
    %c0_168 = arith.constant 0 : index
    %169 = vector.load %arg8[%c8_167, %c0_168] : memref<64x128xf32, #tpu.memory_space<vmem>>, vector<8x128xf32>
    %c0_169 = arith.constant 0 : index
    %c0_170 = arith.constant 0 : index
    %170 = vector.load %arg3[%c0_169, %c0_170] : memref<128x128xf32, #tpu.memory_space<vmem>>, vector<128x128xf32>
    %cst_171 = arith.constant dense<0.000000e+00> : vector<8x128xf32>
    %171 = tpu.matmul %167, %170, %cst_171 {dimension_numbers = #tpu.dot_dimension_numbers<[1], [0], [0], [1], [0, 0, 1, 1], [], []>} : vector<8x128xf32>, vector<128x128xf32>, vector<8x128xf32> -> vector<8x128xf32>
    %172 = arith.addf %169, %171 : vector<8x128xf32>
    %173 = math.tanh %172 : vector<8x128xf32>
    %c8_172 = arith.constant 8 : index
    %c0_173 = arith.constant 0 : index
    %174 = vector.load %arg8[%c8_172, %c0_173] : memref<64x128xf32, #tpu.memory_space<vmem>>, vector<8x128xf32>
    tpu.vector_store %arg8[%c8_172, %c0_173], %173 {strides = array<i32>} : memref<64x128xf32, #tpu.memory_space<vmem>>, vector<8x128xf32>,
    %c16_174 = arith.constant 16 : index
    %c0_175 = arith.constant 0 : index
    %175 = vector.load %arg8[%c16_174, %c0_175] : memref<64x128xf32, #tpu.memory_space<vmem>>, vector<8x128xf32>
    %c0_176 = arith.constant 0 : index
    %c0_177 = arith.constant 0 : index
    %176 = vector.load %arg3[%c0_176, %c0_177] : memref<128x128xf32, #tpu.memory_space<vmem>>, vector<128x128xf32>
    %cst_178 = arith.constant dense<0.000000e+00> : vector<8x128xf32>
    %177 = tpu.matmul %173, %176, %cst_178 {dimension_numbers = #tpu.dot_dimension_numbers<[1], [0], [0], [1], [0, 0, 1, 1], [], []>} : vector<8x128xf32>, vector<128x128xf32>, vector<8x128xf32> -> vector<8x128xf32>
    %178 = arith.addf %175, %177 : vector<8x128xf32>
    %179 = math.tanh %178 : vector<8x128xf32>
    %c16_179 = arith.constant 16 : index
    %c0_180 = arith.constant 0 : index
    %180 = vector.load %arg8[%c16_179, %c0_180] : memref<64x128xf32, #tpu.memory_space<vmem>>, vector<8x128xf32>
    tpu.vector_store %arg8[%c16_179, %c0_180], %179 {strides = array<i32>} : memref<64x128xf32, #tpu.memory_space<vmem>>, vector<8x128xf32>,
    %c24_181 = arith.constant 24 : index
    %c0_182 = arith.constant 0 : index
    %181 = vector.load %arg8[%c24_181, %c0_182] : memref<64x128xf32, #tpu.memory_space<vmem>>, vector<8x128xf32>
    %c0_183 = arith.constant 0 : index
    %c0_184 = arith.constant 0 : index
    %182 = vector.load %arg3[%c0_183, %c0_184] : memref<128x128xf32, #tpu.memory_space<vmem>>, vector<128x128xf32>
    %cst_185 = arith.constant dense<0.000000e+00> : vector<8x128xf32>
    %183 = tpu.matmul %179, %182, %cst_185 {dimension_numbers = #tpu.dot_dimension_numbers<[1], [0], [0], [1], [0, 0, 1, 1], [], []>} : vector<8x128xf32>, vector<128x128xf32>, vector<8x128xf32> -> vector<8x128xf32>
    %184 = arith.addf %181, %183 : vector<8x128xf32>
    %185 = math.tanh %184 : vector<8x128xf32>
    %c24_186 = arith.constant 24 : index
    %c0_187 = arith.constant 0 : index
    %186 = vector.load %arg8[%c24_186, %c0_187] : memref<64x128xf32, #tpu.memory_space<vmem>>, vector<8x128xf32>
    tpu.vector_store %arg8[%c24_186, %c0_187], %185 {strides = array<i32>} : memref<64x128xf32, #tpu.memory_space<vmem>>, vector<8x128xf32>,
    %c32_188 = arith.constant 32 : index
    %c0_189 = arith.constant 0 : index
    %187 = vector.load %arg8[%c32_188, %c0_189] : memref<64x128xf32, #tpu.memory_space<vmem>>, vector<8x128xf32>
    %c0_190 = arith.constant 0 : index
    %c0_191 = arith.constant 0 : index
    %188 = vector.load %arg3[%c0_190, %c0_191] : memref<128x128xf32, #tpu.memory_space<vmem>>, vector<128x128xf32>
    %cst_192 = arith.constant dense<0.000000e+00> : vector<8x128xf32>
    %189 = tpu.matmul %185, %188, %cst_192 {dimension_numbers = #tpu.dot_dimension_numbers<[1], [0], [0], [1], [0, 0, 1, 1], [], []>} : vector<8x128xf32>, vector<128x128xf32>, vector<8x128xf32> -> vector<8x128xf32>
    %190 = arith.addf %187, %189 : vector<8x128xf32>
    %191 = math.tanh %190 : vector<8x128xf32>
    %c32_193 = arith.constant 32 : index
    %c0_194 = arith.constant 0 : index
    %192 = vector.load %arg8[%c32_193, %c0_194] : memref<64x128xf32, #tpu.memory_space<vmem>>, vector<8x128xf32>
    tpu.vector_store %arg8[%c32_193, %c0_194], %191 {strides = array<i32>} : memref<64x128xf32, #tpu.memory_space<vmem>>, vector<8x128xf32>,
    %c40_195 = arith.constant 40 : index
    %c0_196 = arith.constant 0 : index
    %193 = vector.load %arg8[%c40_195, %c0_196] : memref<64x128xf32, #tpu.memory_space<vmem>>, vector<8x128xf32>
    %c0_197 = arith.constant 0 : index
    %c0_198 = arith.constant 0 : index
    %194 = vector.load %arg3[%c0_197, %c0_198] : memref<128x128xf32, #tpu.memory_space<vmem>>, vector<128x128xf32>
    %cst_199 = arith.constant dense<0.000000e+00> : vector<8x128xf32>
    %195 = tpu.matmul %191, %194, %cst_199 {dimension_numbers = #tpu.dot_dimension_numbers<[1], [0], [0], [1], [0, 0, 1, 1], [], []>} : vector<8x128xf32>, vector<128x128xf32>, vector<8x128xf32> -> vector<8x128xf32>
    %196 = arith.addf %193, %195 : vector<8x128xf32>
    %197 = math.tanh %196 : vector<8x128xf32>
    %c40_200 = arith.constant 40 : index
    %c0_201 = arith.constant 0 : index
    %198 = vector.load %arg8[%c40_200, %c0_201] : memref<64x128xf32, #tpu.memory_space<vmem>>, vector<8x128xf32>
    tpu.vector_store %arg8[%c40_200, %c0_201], %197 {strides = array<i32>} : memref<64x128xf32, #tpu.memory_space<vmem>>, vector<8x128xf32>,
    %c48_202 = arith.constant 48 : index
    %c0_203 = arith.constant 0 : index
    %199 = vector.load %arg8[%c48_202, %c0_203] : memref<64x128xf32, #tpu.memory_space<vmem>>, vector<8x128xf32>
    %c0_204 = arith.constant 0 : index
    %c0_205 = arith.constant 0 : index
    %200 = vector.load %arg3[%c0_204, %c0_205] : memref<128x128xf32, #tpu.memory_space<vmem>>, vector<128x128xf32>
    %cst_206 = arith.constant dense<0.000000e+00> : vector<8x128xf32>
    %201 = tpu.matmul %197, %200, %cst_206 {dimension_numbers = #tpu.dot_dimension_numbers<[1], [0], [0], [1], [0, 0, 1, 1], [], []>} : vector<8x128xf32>, vector<128x128xf32>, vector<8x128xf32> -> vector<8x128xf32>
    %202 = arith.addf %199, %201 : vector<8x128xf32>
    %203 = math.tanh %202 : vector<8x128xf32>
    %c48_207 = arith.constant 48 : index
    %c0_208 = arith.constant 0 : index
    %204 = vector.load %arg8[%c48_207, %c0_208] : memref<64x128xf32, #tpu.memory_space<vmem>>, vector<8x128xf32>
    tpu.vector_store %arg8[%c48_207, %c0_208], %203 {strides = array<i32>} : memref<64x128xf32, #tpu.memory_space<vmem>>, vector<8x128xf32>,
    %c56_209 = arith.constant 56 : index
    %c0_210 = arith.constant 0 : index
    %205 = vector.load %arg8[%c56_209, %c0_210] : memref<64x128xf32, #tpu.memory_space<vmem>>, vector<8x128xf32>
    %c0_211 = arith.constant 0 : index
    %c0_212 = arith.constant 0 : index
    %206 = vector.load %arg3[%c0_211, %c0_212] : memref<128x128xf32, #tpu.memory_space<vmem>>, vector<128x128xf32>
    %cst_213 = arith.constant dense<0.000000e+00> : vector<8x128xf32>
    %207 = tpu.matmul %203, %206, %cst_213 {dimension_numbers = #tpu.dot_dimension_numbers<[1], [0], [0], [1], [0, 0, 1, 1], [], []>} : vector<8x128xf32>, vector<128x128xf32>, vector<8x128xf32> -> vector<8x128xf32>
    %208 = arith.addf %205, %207 : vector<8x128xf32>
    %209 = math.tanh %208 : vector<8x128xf32>
    %c56_214 = arith.constant 56 : index
    %c0_215 = arith.constant 0 : index
    %210 = vector.load %arg8[%c56_214, %c0_215] : memref<64x128xf32, #tpu.memory_space<vmem>>, vector<8x128xf32>
    tpu.vector_store %arg8[%c56_214, %c0_215], %209 {strides = array<i32>} : memref<64x128xf32, #tpu.memory_space<vmem>>, vector<8x128xf32>,
    %c0_216 = arith.constant 0 : index
    %c0_217 = arith.constant 0 : index
    %211 = vector.load %arg7[%c0_216, %c0_217] : memref<8x128xf32, #tpu.memory_space<vmem>>, vector<8x128xf32>
    tpu.vector_store %arg7[%c0_216, %c0_217], %209 {strides = array<i32>} : memref<8x128xf32, #tpu.memory_space<vmem>>, vector<8x128xf32>,
    %c0_218 = arith.constant 0 : index
    %c0_219 = arith.constant 0 : index
    %212 = vector.load %arg8[%c0_218, %c0_219] : memref<64x128xf32, #tpu.memory_space<vmem>>, vector<64x128xf32>
    %c0_220 = arith.constant 0 : index
    %c0_221 = arith.constant 0 : index
    %213 = vector.load %arg4[%c0_220, %c0_221] : memref<128x128xf32, #tpu.memory_space<vmem>>, vector<128x128xf32>
    %cst_222 = arith.constant dense<0.000000e+00> : vector<64x128xf32>
    %214 = tpu.matmul %212, %213, %cst_222 {dimension_numbers = #tpu.dot_dimension_numbers<[1], [0], [0], [1], [0, 0, 1, 1], [], []>} : vector<64x128xf32>, vector<128x128xf32>, vector<64x128xf32> -> vector<64x128xf32>
    %c0_223 = arith.constant 0 : index
    %c0_224 = arith.constant 0 : index
    %215 = vector.load %arg5[%c0_223, %c0_224] : memref<1x128xf32, #tpu.memory_space<vmem>>, vector<1x128xf32>
    %216 = vector.broadcast %215 : vector<1x128xf32> to vector<64x128xf32>
    %217 = arith.addf %214, %216 : vector<64x128xf32>
    %c0_225 = arith.constant 0 : index
    %c0_226 = arith.constant 0 : index
    %218 = vector.load %arg6[%c0_225, %c0_226] : memref<64x128xf32, #tpu.memory_space<vmem>>, vector<64x128xf32>
    tpu.vector_store %arg6[%c0_225, %c0_226], %217 {strides = array<i32>} : memref<64x128xf32, #tpu.memory_space<vmem>>, vector<64x128xf32>,
    return
  }
}

</mosaic_0001>

<llo_original>
// kernel: fwd.1
$region0: #{fwd.1}
  #allocation0 [shape = 'u32[]', space=smem, size = 0x4, offset = 0x4, fixed_abs, tag = 'smem constant byte address 0x4 - core index']
  #allocation1 [shape = 'u32[72,128]{1,0:T(1,128)}', space=vmem, size = 0x9000, scoped, tag = 'internal scratch']
  #allocation2 [shape = 'f32[64,128]{1,0:T(8,128)}', space=vmem, size = 0x8000, scoped, tag = 'scratch operand']
  %s0 = inlined_call_operand.vmem [shape: s32[8,4], index: 0, kind: input, shape index: {}]
  %s1 = inlined_call_operand.hbm [shape: f32[32,1,128], index: 1, kind: input, shape index: {}]
  %s2 = inlined_call_operand.vmem [shape: f32[8,128], index: 2, kind: input, shape index: {}]
  %s3 = inlined_call_operand.hbm [shape: f32[128,128], index: 3, kind: input, shape index: {}]
  %s4 = inlined_call_operand.hbm [shape: f32[128,128], index: 4, kind: input, shape index: {}]
  %s5 = inlined_call_operand.vmem [shape: f32[1,128], index: 5, kind: input, shape index: {}]
  %s6 = inlined_call_operand.vmem [shape: f32[64,128], index: 6, kind: output, shape index: {0}]
  %s7 = inlined_call_operand.vmem [shape: f32[8,128], index: 7, kind: output, shape index: {1}]
  %8 = xla_tuple %s6, %s7
  %s9 = sld [smem:[#allocation0]]
  $region58: #{fwd.1} parent=0
    _
  %s11 = ssub.s32 1, %s9
  %s12 = scalar_select 0, %s11, %s9
  $region1: #{fwd.1} parent=0
    #allocation3 [shape = 'u8[4096]{0}', space=smem, size = 0x1000, scoped, tag = 'input window, operand 0, single buffered']
    #allocation4 [shape = 's32[1]{0}', space=sflag, size = 0x4, scoped, tag = 'scoped memory for fwd.1']
    #allocation5 [shape = 's32[1]{0}', space=sflag, size = 0x4, scoped, tag = 'scoped memory for fwd.1']
    #allocation6 [shape = 'u8[16384]{0}', space=vmem, size = 0x4000, scoped, tag = 'input window, operand 1, single buffered']
    #allocation7 [shape = 'u8[65536]{0}', space=vmem, size = 0x10000, scoped, tag = 'input window, operand 3, single buffered']
    #allocation8 [shape = 's32[1]{0}', space=sflag, size = 0x4, scoped, tag = 'scoped memory for fwd.1']
    #allocation9 [shape = 'u8[65536]{0}', space=vmem, size = 0x10000, scoped, tag = 'input window, operand 4, single buffered']
    %13 = vsyncpa [#allocation5], 0
    %14 = vsyncpa [#allocation4], 0
    %15 = vsyncpa [#allocation8], 0
    // Predicated region
    $region2: #{fwd.1} parent=1 // pred_check
      _
    $region3: #{fwd.1} parent=1 // pred_check_branch
      %17 = sbr.rel (0) target = $region5
    $region4: #{fwd.1} parent=1 // pred_region
      %19 = vsyncadd [#allocation5], 0
      %s21 = sshll.u32 %s0, 4
      %s22 = int_to_ptr.vmem [resolvable:$true] %s21
      %24 = dma.vmem_to_smem %s22, 128, [#allocation3], [#allocation5]
    $region5: #{fwd.1} parent=1 // pred_fallthru
      _
    // Predicated region
    $region6: #{fwd.1} parent=1 // pred_check
      _
    $region7: #{fwd.1} parent=1 // pred_check_branch
      %26 = sbr.rel (0) target = $region9
    $region8: #{fwd.1} parent=1 // pred_region
      %28 = vsyncadd [#allocation4], 0
      %s29 = sshll.u32 %s1, 4
      %s30 = int_to_ptr.hbm [resolvable:$true] %s29
      %s31 = sshll.u32 [#allocation6], 4
      %s32 = int_to_ptr.vmem [resolvable:$true] %s31
      %37 = dma.hbm_to_vmem [thread:$0]  %s30, 512, %s32, [#allocation4], 16, 16, 1
    $region9: #{fwd.1} parent=1 // pred_fallthru
      _
    // Predicated region
    $region10: #{fwd.1} parent=1 // pred_check
      _
    $region11: #{fwd.1} parent=1 // pred_check_branch
      %39 = sbr.rel (0) target = $region13
    $region12: #{fwd.1} parent=1 // pred_region
      _
    $region13: #{fwd.1} parent=1 // pred_fallthru
      _
    // Predicated region
    $region14: #{fwd.1} parent=1 // pred_check
      _
    $region15: #{fwd.1} parent=1 // pred_check_branch
      %41 = sbr.rel (0) target = $region17
    $region16: #{fwd.1} parent=1 // pred_region
      %43 = vsyncadd [#allocation8], 0
      %s44 = sshll.u32 %s3, 4
      %s45 = int_to_ptr.hbm [resolvable:$true] %s44
      %s46 = sshll.u32 [#allocation7], 4
      %s47 = int_to_ptr.vmem [resolvable:$true] %s46
      %52 = dma.hbm_to_vmem [thread:$0]  %s45, 2048, %s47, [#allocation8], 128, 128, 8
    $region17: #{fwd.1} parent=1 // pred_fallthru
      _
    // Predicated region
    $region18: #{fwd.1} parent=1 // pred_check
      _
    $region19: #{fwd.1} parent=1 // pred_check_branch
      %54 = sbr.rel (0) target = $region21
    $region20: #{fwd.1} parent=1 // pred_region
      %56 = vsyncadd [#allocation8], 0
      %s57 = sshll.u32 %s4, 4
      %s58 = int_to_ptr.hbm [resolvable:$true] %s57
      %s59 = sshll.u32 [#allocation9], 4
      %s60 = int_to_ptr.vmem [resolvable:$true] %s59
      %65 = dma.hbm_to_vmem [thread:$0]  %s58, 2048, %s60, [#allocation8], 128, 128, 8
    $region21: #{fwd.1} parent=1 // pred_fallthru
      _
    // Predicated region
    $region22: #{fwd.1} parent=1 // pred_check
      _
    $region23: #{fwd.1} parent=1 // pred_check_branch
      %67 = sbr.rel (0) target = $region25
    $region24: #{fwd.1} parent=1 // pred_region
      _
    $region25: #{fwd.1} parent=1 // pred_fallthru
      _
    // Predicated region
    $region26: #{fwd.1} parent=1 // pred_check
      _
    $region27: #{fwd.1} parent=1 // pred_check_branch
      %69 = sbr.rel (0) target = $region29
    $region28: #{fwd.1} parent=1 // pred_region
      %71 = dma.done [#allocation5], 128
    $region29: #{fwd.1} parent=1 // pred_fallthru
      _
    // Predicated region
    $region30: #{fwd.1} parent=1 // pred_check
      _
    $region31: #{fwd.1} parent=1 // pred_check_branch
      %73 = sbr.rel (0) target = $region33
    $region32: #{fwd.1} parent=1 // pred_region
      %75 = dma.done [#allocation4], 512
    $region33: #{fwd.1} parent=1 // pred_fallthru
      _
    // Predicated region
    $region34: #{fwd.1} parent=1 // pred_check
      _
    $region35: #{fwd.1} parent=1 // pred_check_branch
      %77 = sbr.rel (0) target = $region37
    $region36: #{fwd.1} parent=1 // pred_region
      %79 = dma.done [#allocation8], 2048
    $region37: #{fwd.1} parent=1 // pred_fallthru
      _
    // Predicated region
    $region38: #{fwd.1} parent=1 // pred_check
      _
    $region39: #{fwd.1} parent=1 // pred_check_branch
      %81 = sbr.rel (0) target = $region41
    $region40: #{fwd.1} parent=1 // pred_region
      %83 = dma.done [#allocation8], 2048
    $region41: #{fwd.1} parent=1 // pred_fallthru
      _
    %84 = sfence
    %85 = vst [vmem:[#allocation2] sm:$0xff] 0.0
    %86 = vst [vmem:[#allocation2 + $0x8] sm:$0xff] 0.0
    %87 = vst [vmem:[#allocation2 + $0x10] sm:$0xff] 0.0
    %88 = vst [vmem:[#allocation2 + $0x18] sm:$0xff] 0.0
    %89 = vst [vmem:[#allocation2 + $0x20] sm:$0xff] 0.0
    %90 = vst [vmem:[#allocation2 + $0x28] sm:$0xff] 0.0
    %91 = vst [vmem:[#allocation2 + $0x30] sm:$0xff] 0.0
    %92 = vst [vmem:[#allocation2 + $0x38] sm:$0xff] 0.0
    %s93 = sld [smem:[#allocation3]]
    %s94 = scalar_lea.vmem [#allocation6], %s93
    %v95 = vld [vmem:[%s94] sm:$0x1]
    %96 = vst [vmem:[#allocation2] sm:$0x1] %v95
    %s97 = sld [smem:[#allocation3 + $0x1]]
    %s98 = scalar_lea.vmem [#allocation6], %s97
    %v99 = vld [vmem:[%s98] sm:$0x1]
    %100 = vst [vmem:[#allocation2 + $0x1] sm:$0x1] %v99
    %s101 = sld [smem:[#allocation3 + $0x2]]
    %s102 = scalar_lea.vmem [#allocation6], %s101
    %v103 = vld [vmem:[%s102] sm:$0x1]
    %104 = vst [vmem:[#allocation2 + $0x2] sm:$0x1] %v103
    %s105 = sld [smem:[#allocation3 + $0x3]]
    %s106 = scalar_lea.vmem [#allocation6], %s105
    %v107 = vld [vmem:[%s106] sm:$0x1]
    %108 = vst [vmem:[#allocation2 + $0x3] sm:$0x1] %v107
    %s109 = sld [smem:[#allocation3 + $0x80]]
    %s110 = scalar_lea.vmem [#allocation6], %s109
    %v111 = vld [vmem:[%s110] sm:$0x1]
    %112 = vst [vmem:[#allocation2 + $0x8] sm:$0x1] %v111
    %s113 = sld [smem:[#allocation3 + $0x81]]
    %s114 = scalar_lea.vmem [#allocation6], %s113
    %v115 = vld [vmem:[%s114] sm:$0x1]
    %116 = vst [vmem:[#allocation2 + $0x9] sm:$0x1] %v115
    %s117 = sld [smem:[#allocation3 + $0x82]]
    %s118 = scalar_lea.vmem [#allocation6], %s117
    %v119 = vld [vmem:[%s118] sm:$0x1]
    %120 = vst [vmem:[#allocation2 + $0xa] sm:$0x1] %v119
    %s121 = sld [smem:[#allocation3 + $0x83]]
    %s122 = scalar_lea.vmem [#allocation6], %s121
    %v123 = vld [vmem:[%s122] sm:$0x1]
    %124 = vst [vmem:[#allocation2 + $0xb] sm:$0x1] %v123
    %s125 = sld [smem:[#allocation3 + $0x100]]
    %s126 = scalar_lea.vmem [#allocation6], %s125
    %v127 = vld [vmem:[%s126] sm:$0x1]
    %128 = vst [vmem:[#allocation2 + $0x10] sm:$0x1] %v127
    %s129 = sld [smem:[#allocation3 + $0x101]]
    %s130 = scalar_lea.vmem [#allocation6], %s129
    %v131 = vld [vmem:[%s130] sm:$0x1]
    %132 = vst [vmem:[#allocation2 + $0x11] sm:$0x1] %v131
    %s133 = sld [smem:[#allocation3 + $0x102]]
    %s134 = scalar_lea.vmem [#allocation6], %s133
    %v135 = vld [vmem:[%s134] sm:$0x1]
    %136 = vst [vmem:[#allocation2 + $0x12] sm:$0x1] %v135
    %s137 = sld [smem:[#allocation3 + $0x103]]
    %s138 = scalar_lea.vmem [#allocation6], %s137
    %v139 = vld [vmem:[%s138] sm:$0x1]
    %140 = vst [vmem:[#allocation2 + $0x13] sm:$0x1] %v139
    %s141 = sld [smem:[#allocation3 + $0x180]]
    %s142 = scalar_lea.vmem [#allocation6], %s141
    %v143 = vld [vmem:[%s142] sm:$0x1]
    %144 = vst [vmem:[#allocation2 + $0x18] sm:$0x1] %v143
    %s145 = sld [smem:[#allocation3 + $0x181]]
    %s146 = scalar_lea.vmem [#allocation6], %s145
    %v147 = vld [vmem:[%s146] sm:$0x1]
    %148 = vst [vmem:[#allocation2 + $0x19] sm:$0x1] %v147
    %s149 = sld [smem:[#allocation3 + $0x182]]
    %s150 = scalar_lea.vmem [#allocation6], %s149
    %v151 = vld [vmem:[%s150] sm:$0x1]
    %152 = vst [vmem:[#allocation2 + $0x1a] sm:$0x1] %v151
    %s153 = sld [smem:[#allocation3 + $0x183]]
    %s154 = scalar_lea.vmem [#allocation6], %s153
    %v155 = vld [vmem:[%s154] sm:$0x1]
    %156 = vst [vmem:[#allocation2 + $0x1b] sm:$0x1] %v155
    %s157 = sld [smem:[#allocation3 + $0x200]]
    %s158 = scalar_lea.vmem [#allocation6], %s157
    %v159 = vld [vmem:[%s158] sm:$0x1]
    %160 = vst [vmem:[#allocation2 + $0x20] sm:$0x1] %v159
    %s161 = sld [smem:[#allocation3 + $0x201]]
    %s162 = scalar_lea.vmem [#allocation6], %s161
    %v163 = vld [vmem:[%s162] sm:$0x1]
    %164 = vst [vmem:[#allocation2 + $0x21] sm:$0x1] %v163
    %s165 = sld [smem:[#allocation3 + $0x202]]
    %s166 = scalar_lea.vmem [#allocation6], %s165
    %v167 = vld [vmem:[%s166] sm:$0x1]
    %168 = vst [vmem:[#allocation2 + $0x22] sm:$0x1] %v167
    %s169 = sld [smem:[#allocation3 + $0x203]]
    %s170 = scalar_lea.vmem [#allocation6], %s169
    %v171 = vld [vmem:[%s170] sm:$0x1]
    %172 = vst [vmem:[#allocation2 + $0x23] sm:$0x1] %v171
    %s173 = sld [smem:[#allocation3 + $0x280]]
    %s174 = scalar_lea.vmem [#allocation6], %s173
    %v175 = vld [vmem:[%s174] sm:$0x1]
    %176 = vst [vmem:[#allocation2 + $0x28] sm:$0x1] %v175
    %s177 = sld [smem:[#allocation3 + $0x281]]
    %s178 = scalar_lea.vmem [#allocation6], %s177
    %v179 = vld [vmem:[%s178] sm:$0x1]
    %180 = vst [vmem:[#allocation2 + $0x29] sm:$0x1] %v179
    %s181 = sld [smem:[#allocation3 + $0x282]]
    %s182 = scalar_lea.vmem [#allocation6], %s181
    %v183 = vld [vmem:[%s182] sm:$0x1]
    %184 = vst [vmem:[#allocation2 + $0x2a] sm:$0x1] %v183
    %s185 = sld [smem:[#allocation3 + $0x283]]
    %s186 = scalar_lea.vmem [#allocation6], %s185
    %v187 = vld [vmem:[%s186] sm:$0x1]
    %188 = vst [vmem:[#allocation2 + $0x2b] sm:$0x1] %v187
    %s189 = sld [smem:[#allocation3 + $0x300]]
    %s190 = scalar_lea.vmem [#allocation6], %s189
    %v191 = vld [vmem:[%s190] sm:$0x1]
    %192 = vst [vmem:[#allocation2 + $0x30] sm:$0x1] %v191
    %s193 = sld [smem:[#allocation3 + $0x301]]
    %s194 = scalar_lea.vmem [#allocation6], %s193
    %v195 = vld [vmem:[%s194] sm:$0x1]
    %196 = vst [vmem:[#allocation2 + $0x31] sm:$0x1] %v195
    %s197 = sld [smem:[#allocation3 + $0x302]]
    %s198 = scalar_lea.vmem [#allocation6], %s197
    %v199 = vld [vmem:[%s198] sm:$0x1]
    %200 = vst [vmem:[#allocation2 + $0x32] sm:$0x1] %v199
    %s201 = sld [smem:[#allocation3 + $0x303]]
    %s202 = scalar_lea.vmem [#allocation6], %s201
    %v203 = vld [vmem:[%s202] sm:$0x1]
    %204 = vst [vmem:[#allocation2 + $0x33] sm:$0x1] %v203
    %s205 = sld [smem:[#allocation3 + $0x380]]
    %s206 = scalar_lea.vmem [#allocation6], %s205
    %v207 = vld [vmem:[%s206] sm:$0x1]
    %208 = vst [vmem:[#allocation2 + $0x38] sm:$0x1] %v207
    %s209 = sld [smem:[#allocation3 + $0x381]]
    %s210 = scalar_lea.vmem [#allocation6], %s209
    %v211 = vld [vmem:[%s210] sm:$0x1]
    %212 = vst [vmem:[#allocation2 + $0x39] sm:$0x1] %v211
    %s213 = sld [smem:[#allocation3 + $0x382]]
    %s214 = scalar_lea.vmem [#allocation6], %s213
    %v215 = vld [vmem:[%s214] sm:$0x1]
    %216 = vst [vmem:[#allocation2 + $0x3a] sm:$0x1] %v215
    %s217 = sld [smem:[#allocation3 + $0x383]]
    %s218 = scalar_lea.vmem [#allocation6], %s217
    %v219 = vld [vmem:[%s218] sm:$0x1]
    %220 = vst [vmem:[#allocation2 + $0x3b] sm:$0x1] %v219
    %v221 = vld [vmem:[%s2] sm:$0xff]
    %v222 = vld [vmem:[#allocation2] sm:$0xff]
    %v223 = vld [vmem:[#allocation7] sm:$0xff]
    %v224 = vld [vmem:[#allocation7 + $0x8] sm:$0xff]
    %v225 = vld [vmem:[#allocation7 + $0x10] sm:$0xff]
    %v226 = vld [vmem:[#allocation7 + $0x18] sm:$0xff]
    %v227 = vld [vmem:[#allocation7 + $0x20] sm:$0xff]
    %v228 = vld [vmem:[#allocation7 + $0x28] sm:$0xff]
    %v229 = vld [vmem:[#allocation7 + $0x30] sm:$0xff]
    %v230 = vld [vmem:[#allocation7 + $0x38] sm:$0xff]
    %v231 = vld [vmem:[#allocation7 + $0x40] sm:$0xff]
    %v232 = vld [vmem:[#allocation7 + $0x48] sm:$0xff]
    %v233 = vld [vmem:[#allocation7 + $0x50] sm:$0xff]
    %v234 = vld [vmem:[#allocation7 + $0x58] sm:$0xff]
    %v235 = vld [vmem:[#allocation7 + $0x60] sm:$0xff]
    %v236 = vld [vmem:[#allocation7 + $0x68] sm:$0xff]
    %v237 = vld [vmem:[#allocation7 + $0x70] sm:$0xff]
    %v238 = vld [vmem:[#allocation7 + $0x78] sm:$0xff]
    %239 = vmatpush.msra.mxu0 %v238
    %240 = vmatpush.msra.mxu0 %v237
    %241 = vmatpush.msra.mxu0 %v236
    %242 = vmatpush.msra.mxu0 %v235
    %243 = vmatpush.msra.mxu0 %v234
    %244 = vmatpush.msra.mxu0 %v233
    %245 = vmatpush.msra.mxu0 %v232
    %246 = vmatpush.msra.mxu0 %v231
    %247 = vmatpush.msra.mxu0 %v230
    %248 = vmatpush.msra.mxu0 %v229
    %249 = vmatpush.msra.mxu0 %v228
    %250 = vmatpush.msra.mxu0 %v227
    %251 = vmatpush.msra.mxu0 %v226
    %252 = vmatpush.msra.mxu0 %v225
    %253 = vmatpush.msra.mxu0 %v224
    %254 = vmatpush.msra.mxu0 %v223
    %255 = vmatmul.f32.gmra.mxu0 %v221
    %v256 = vpop.f32.mrf.mxu0
    %v257 = vadd.f32 0.0, %v256
    %258 = vdwg.mxu0
    %v259 = vadd.f32 %v222, %v257
    %v260 = vtanh.pop %v259
    %261 = vst [vmem:[#allocation2] sm:$0xff] %v260
    %v262 = vld [vmem:[#allocation2 + $0x8] sm:$0xff]
    %v263 = vld [vmem:[#allocation7] sm:$0xff]
    %v264 = vld [vmem:[#allocation7 + $0x8] sm:$0xff]
    %v265 = vld [vmem:[#allocation7 + $0x10] sm:$0xff]
    %v266 = vld [vmem:[#allocation7 + $0x18] sm:$0xff]
    %v267 = vld [vmem:[#allocation7 + $0x20] sm:$0xff]
    %v268 = vld [vmem:[#allocation7 + $0x28] sm:$0xff]
    %v269 = vld [vmem:[#allocation7 + $0x30] sm:$0xff]
    %v270 = vld [vmem:[#allocation7 + $0x38] sm:$0xff]
    %v271 = vld [vmem:[#allocation7 + $0x40] sm:$0xff]
    %v272 = vld [vmem:[#allocation7 + $0x48] sm:$0xff]
    %v273 = vld [vmem:[#allocation7 + $0x50] sm:$0xff]
    %v274 = vld [vmem:[#allocation7 + $0x58] sm:$0xff]
    %v275 = vld [vmem:[#allocation7 + $0x60] sm:$0xff]
    %v276 = vld [vmem:[#allocation7 + $0x68] sm:$0xff]
    %v277 = vld [vmem:[#allocation7 + $0x70] sm:$0xff]
    %v278 = vld [vmem:[#allocation7 + $0x78] sm:$0xff]
    %279 = vmatpush.msra.mxu0 %v278
    %280 = vmatpush.msra.mxu0 %v277
    %281 = vmatpush.msra.mxu0 %v276
    %282 = vmatpush.msra.mxu0 %v275
    %283 = vmatpush.msra.mxu0 %v274
    %284 = vmatpush.msra.mxu0 %v273
    %285 = vmatpush.msra.mxu0 %v272
    %286 = vmatpush.msra.mxu0 %v271
    %287 = vmatpush.msra.mxu0 %v270
    %288 = vmatpush.msra.mxu0 %v269
    %289 = vmatpush.msra.mxu0 %v268
    %290 = vmatpush.msra.mxu0 %v267
    %291 = vmatpush.msra.mxu0 %v266
    %292 = vmatpush.msra.mxu0 %v265
    %293 = vmatpush.msra.mxu0 %v264
    %294 = vmatpush.msra.mxu0 %v263
    %295 = vmatmul.f32.gmra.mxu0 %v260
    %v296 = vpop.f32.mrf.mxu0
    %v297 = vadd.f32 0.0, %v296
    %298 = vdwg.mxu0
    %v299 = vadd.f32 %v262, %v297
    %v300 = vtanh.pop %v299
    %301 = vst [vmem:[#allocation2 + $0x8] sm:$0xff] %v300
    %v302 = vld [vmem:[#allocation2 + $0x10] sm:$0xff]
    %v303 = vld [vmem:[#allocation7] sm:$0xff]
    %v304 = vld [vmem:[#allocation7 + $0x8] sm:$0xff]
    %v305 = vld [vmem:[#allocation7 + $0x10] sm:$0xff]
    %v306 = vld [vmem:[#allocation7 + $0x18] sm:$0xff]
    %v307 = vld [vmem:[#allocation7 + $0x20] sm:$0xff]
    %v308 = vld [vmem:[#allocation7 + $0x28] sm:$0xff]
    %v309 = vld [vmem:[#allocation7 + $0x30] sm:$0xff]
    %v310 = vld [vmem:[#allocation7 + $0x38] sm:$0xff]
    %v311 = vld [vmem:[#allocation7 + $0x40] sm:$0xff]
    %v312 = vld [vmem:[#allocation7 + $0x48] sm:$0xff]
    %v313 = vld [vmem:[#allocation7 + $0x50] sm:$0xff]
    %v314 = vld [vmem:[#allocation7 + $0x58] sm:$0xff]
    %v315 = vld [vmem:[#allocation7 + $0x60] sm:$0xff]
    %v316 = vld [vmem:[#allocation7 + $0x68] sm:$0xff]
    %v317 = vld [vmem:[#allocation7 + $0x70] sm:$0xff]
    %v318 = vld [vmem:[#allocation7 + $0x78] sm:$0xff]
    %319 = vmatpush.msra.mxu0 %v318
    %320 = vmatpush.msra.mxu0 %v317
    %321 = vmatpush.msra.mxu0 %v316
    %322 = vmatpush.msra.mxu0 %v315
    %323 = vmatpush.msra.mxu0 %v314
    %324 = vmatpush.msra.mxu0 %v313
    %325 = vmatpush.msra.mxu0 %v312
    %326 = vmatpush.msra.mxu0 %v311
    %327 = vmatpush.msra.mxu0 %v310
    %328 = vmatpush.msra.mxu0 %v309
    %329 = vmatpush.msra.mxu0 %v308
    %330 = vmatpush.msra.mxu0 %v307
    %331 = vmatpush.msra.mxu0 %v306
    %332 = vmatpush.msra.mxu0 %v305
    %333 = vmatpush.msra.mxu0 %v304
    %334 = vmatpush.msra.mxu0 %v303
    %335 = vmatmul.f32.gmra.mxu0 %v300
    %v336 = vpop.f32.mrf.mxu0
    %v337 = vadd.f32 0.0, %v336
    %338 = vdwg.mxu0
    %v339 = vadd.f32 %v302, %v337
    %v340 = vtanh.pop %v339
    %341 = vst [vmem:[#allocation2 + $0x10] sm:$0xff] %v340
    %v342 = vld [vmem:[#allocation2 + $0x18] sm:$0xff]
    %v343 = vld [vmem:[#allocation7] sm:$0xff]
    %v344 = vld [vmem:[#allocation7 + $0x8] sm:$0xff]
    %v345 = vld [vmem:[#allocation7 + $0x10] sm:$0xff]
    %v346 = vld [vmem:[#allocation7 + $0x18] sm:$0xff]
    %v347 = vld [vmem:[#allocation7 + $0x20] sm:$0xff]
    %v348 = vld [vmem:[#allocation7 + $0x28] sm:$0xff]
    %v349 = vld [vmem:[#allocation7 + $0x30] sm:$0xff]
    %v350 = vld [vmem:[#allocation7 + $0x38] sm:$0xff]
    %v351 = vld [vmem:[#allocation7 + $0x40] sm:$0xff]
    %v352 = vld [vmem:[#allocation7 + $0x48] sm:$0xff]
    %v353 = vld [vmem:[#allocation7 + $0x50] sm:$0xff]
    %v354 = vld [vmem:[#allocation7 + $0x58] sm:$0xff]
    %v355 = vld [vmem:[#allocation7 + $0x60] sm:$0xff]
    %v356 = vld [vmem:[#allocation7 + $0x68] sm:$0xff]
    %v357 = vld [vmem:[#allocation7 + $0x70] sm:$0xff]
    %v358 = vld [vmem:[#allocation7 + $0x78] sm:$0xff]
    %359 = vmatpush.msra.mxu0 %v358
    %360 = vmatpush.msra.mxu0 %v357
    %361 = vmatpush.msra.mxu0 %v356
    %362 = vmatpush.msra.mxu0 %v355
    %363 = vmatpush.msra.mxu0 %v354
    %364 = vmatpush.msra.mxu0 %v353
    %365 = vmatpush.msra.mxu0 %v352
    %366 = vmatpush.msra.mxu0 %v351
    %367 = vmatpush.msra.mxu0 %v350
    %368 = vmatpush.msra.mxu0 %v349
    %369 = vmatpush.msra.mxu0 %v348
    %370 = vmatpush.msra.mxu0 %v347
    %371 = vmatpush.msra.mxu0 %v346
    %372 = vmatpush.msra.mxu0 %v345
    %373 = vmatpush.msra.mxu0 %v344
    %374 = vmatpush.msra.mxu0 %v343
    %375 = vmatmul.f32.gmra.mxu0 %v340
    %v376 = vpop.f32.mrf.mxu0
    %v377 = vadd.f32 0.0, %v376
    %378 = vdwg.mxu0
    %v379 = vadd.f32 %v342, %v377
    %v380 = vtanh.pop %v379
    %381 = vst [vmem:[#allocation2 + $0x18] sm:$0xff] %v380
    %v382 = vld [vmem:[#allocation2 + $0x20] sm:$0xff]
    %v383 = vld [vmem:[#allocation7] sm:$0xff]
    %v384 = vld [vmem:[#allocation7 + $0x8] sm:$0xff]
    %v385 = vld [vmem:[#allocation7 + $0x10] sm:$0xff]
    %v386 = vld [vmem:[#allocation7 + $0x18] sm:$0xff]
    %v387 = vld [vmem:[#allocation7 + $0x20] sm:$0xff]
    %v388 = vld [vmem:[#allocation7 + $0x28] sm:$0xff]
    %v389 = vld [vmem:[#allocation7 + $0x30] sm:$0xff]
    %v390 = vld [vmem:[#allocation7 + $0x38] sm:$0xff]
    %v391 = vld [vmem:[#allocation7 + $0x40] sm:$0xff]
    %v392 = vld [vmem:[#allocation7 + $0x48] sm:$0xff]
    %v393 = vld [vmem:[#allocation7 + $0x50] sm:$0xff]
    %v394 = vld [vmem:[#allocation7 + $0x58] sm:$0xff]
    %v395 = vld [vmem:[#allocation7 + $0x60] sm:$0xff]
    %v396 = vld [vmem:[#allocation7 + $0x68] sm:$0xff]
    %v397 = vld [vmem:[#allocation7 + $0x70] sm:$0xff]
    %v398 = vld [vmem:[#allocation7 + $0x78] sm:$0xff]
    %399 = vmatpush.msra.mxu0 %v398
    %400 = vmatpush.msra.mxu0 %v397
    %401 = vmatpush.msra.mxu0 %v396
    %402 = vmatpush.msra.mxu0 %v395
    %403 = vmatpush.msra.mxu0 %v394
    %404 = vmatpush.msra.mxu0 %v393
    %405 = vmatpush.msra.mxu0 %v392
    %406 = vmatpush.msra.mxu0 %v391
    %407 = vmatpush.msra.mxu0 %v390
    %408 = vmatpush.msra.mxu0 %v389
    %409 = vmatpush.msra.mxu0 %v388
    %410 = vmatpush.msra.mxu0 %v387
    %411 = vmatpush.msra.mxu0 %v386
    %412 = vmatpush.msra.mxu0 %v385
    %413 = vmatpush.msra.mxu0 %v384
    %414 = vmatpush.msra.mxu0 %v383
    %415 = vmatmul.f32.gmra.mxu0 %v380
    %v416 = vpop.f32.mrf.mxu0
    %v417 = vadd.f32 0.0, %v416
    %418 = vdwg.mxu0
    %v419 = vadd.f32 %v382, %v417
    %v420 = vtanh.pop %v419
    %421 = vst [vmem:[#allocation2 + $0x20] sm:$0xff] %v420
    %v422 = vld [vmem:[#allocation2 + $0x28] sm:$0xff]
    %v423 = vld [vmem:[#allocation7] sm:$0xff]
    %v424 = vld [vmem:[#allocation7 + $0x8] sm:$0xff]
    %v425 = vld [vmem:[#allocation7 + $0x10] sm:$0xff]
    %v426 = vld [vmem:[#allocation7 + $0x18] sm:$0xff]
    %v427 = vld [vmem:[#allocation7 + $0x20] sm:$0xff]
    %v428 = vld [vmem:[#allocation7 + $0x28] sm:$0xff]
    %v429 = vld [vmem:[#allocation7 + $0x30] sm:$0xff]
    %v430 = vld [vmem:[#allocation7 + $0x38] sm:$0xff]
    %v431 = vld [vmem:[#allocation7 + $0x40] sm:$0xff]
    %v432 = vld [vmem:[#allocation7 + $0x48] sm:$0xff]
    %v433 = vld [vmem:[#allocation7 + $0x50] sm:$0xff]
    %v434 = vld [vmem:[#allocation7 + $0x58] sm:$0xff]
    %v435 = vld [vmem:[#allocation7 + $0x60] sm:$0xff]
    %v436 = vld [vmem:[#allocation7 + $0x68] sm:$0xff]
    %v437 = vld [vmem:[#allocation7 + $0x70] sm:$0xff]
    %v438 = vld [vmem:[#allocation7 + $0x78] sm:$0xff]
    %439 = vmatpush.msra.mxu0 %v438
    %440 = vmatpush.msra.mxu0 %v437
    %441 = vmatpush.msra.mxu0 %v436
    %442 = vmatpush.msra.mxu0 %v435
    %443 = vmatpush.msra.mxu0 %v434
    %444 = vmatpush.msra.mxu0 %v433
    %445 = vmatpush.msra.mxu0 %v432
    %446 = vmatpush.msra.mxu0 %v431
    %447 = vmatpush.msra.mxu0 %v430
    %448 = vmatpush.msra.mxu0 %v429
    %449 = vmatpush.msra.mxu0 %v428
    %450 = vmatpush.msra.mxu0 %v427
    %451 = vmatpush.msra.mxu0 %v426
    %452 = vmatpush.msra.mxu0 %v425
    %453 = vmatpush.msra.mxu0 %v424
    %454 = vmatpush.msra.mxu0 %v423
    %455 = vmatmul.f32.gmra.mxu0 %v420
    %v456 = vpop.f32.mrf.mxu0
    %v457 = vadd.f32 0.0, %v456
    %458 = vdwg.mxu0
    %v459 = vadd.f32 %v422, %v457
    %v460 = vtanh.pop %v459
    %461 = vst [vmem:[#allocation2 + $0x28] sm:$0xff] %v460
    %v462 = vld [vmem:[#allocation2 + $0x30] sm:$0xff]
    %v463 = vld [vmem:[#allocation7] sm:$0xff]
    %v464 = vld [vmem:[#allocation7 + $0x8] sm:$0xff]
    %v465 = vld [vmem:[#allocation7 + $0x10] sm:$0xff]
    %v466 = vld [vmem:[#allocation7 + $0x18] sm:$0xff]
    %v467 = vld [vmem:[#allocation7 + $0x20] sm:$0xff]
    %v468 = vld [vmem:[#allocation7 + $0x28] sm:$0xff]
    %v469 = vld [vmem:[#allocation7 + $0x30] sm:$0xff]
    %v470 = vld [vmem:[#allocation7 + $0x38] sm:$0xff]
    %v471 = vld [vmem:[#allocation7 + $0x40] sm:$0xff]
    %v472 = vld [vmem:[#allocation7 + $0x48] sm:$0xff]
    %v473 = vld [vmem:[#allocation7 + $0x50] sm:$0xff]
    %v474 = vld [vmem:[#allocation7 + $0x58] sm:$0xff]
    %v475 = vld [vmem:[#allocation7 + $0x60] sm:$0xff]
    %v476 = vld [vmem:[#allocation7 + $0x68] sm:$0xff]
    %v477 = vld [vmem:[#allocation7 + $0x70] sm:$0xff]
    %v478 = vld [vmem:[#allocation7 + $0x78] sm:$0xff]
    %479 = vmatpush.msra.mxu0 %v478
    %480 = vmatpush.msra.mxu0 %v477
    %481 = vmatpush.msra.mxu0 %v476
    %482 = vmatpush.msra.mxu0 %v475
    %483 = vmatpush.msra.mxu0 %v474
    %484 = vmatpush.msra.mxu0 %v473
    %485 = vmatpush.msra.mxu0 %v472
    %486 = vmatpush.msra.mxu0 %v471
    %487 = vmatpush.msra.mxu0 %v470
    %488 = vmatpush.msra.mxu0 %v469
    %489 = vmatpush.msra.mxu0 %v468
    %490 = vmatpush.msra.mxu0 %v467
    %491 = vmatpush.msra.mxu0 %v466
    %492 = vmatpush.msra.mxu0 %v465
    %493 = vmatpush.msra.mxu0 %v464
    %494 = vmatpush.msra.mxu0 %v463
    %495 = vmatmul.f32.gmra.mxu0 %v460
    %v496 = vpop.f32.mrf.mxu0
    %v497 = vadd.f32 0.0, %v496
    %498 = vdwg.mxu0
    %v499 = vadd.f32 %v462, %v497
    %v500 = vtanh.pop %v499
    %501 = vst [vmem:[#allocation2 + $0x30] sm:$0xff] %v500
    %v502 = vld [vmem:[#allocation2 + $0x38] sm:$0xff]
    %v503 = vld [vmem:[#allocation7] sm:$0xff]
    %v504 = vld [vmem:[#allocation7 + $0x8] sm:$0xff]
    %v505 = vld [vmem:[#allocation7 + $0x10] sm:$0xff]
    %v506 = vld [vmem:[#allocation7 + $0x18] sm:$0xff]
    %v507 = vld [vmem:[#allocation7 + $0x20] sm:$0xff]
    %v508 = vld [vmem:[#allocation7 + $0x28] sm:$0xff]
    %v509 = vld [vmem:[#allocation7 + $0x30] sm:$0xff]
    %v510 = vld [vmem:[#allocation7 + $0x38] sm:$0xff]
    %v511 = vld [vmem:[#allocation7 + $0x40] sm:$0xff]
    %v512 = vld [vmem:[#allocation7 + $0x48] sm:$0xff]
    %v513 = vld [vmem:[#allocation7 + $0x50] sm:$0xff]
    %v514 = vld [vmem:[#allocation7 + $0x58] sm:$0xff]
    %v515 = vld [vmem:[#allocation7 + $0x60] sm:$0xff]
    %v516 = vld [vmem:[#allocation7 + $0x68] sm:$0xff]
    %v517 = vld [vmem:[#allocation7 + $0x70] sm:$0xff]
    %v518 = vld [vmem:[#allocation7 + $0x78] sm:$0xff]
    %519 = vmatpush.msra.mxu0 %v518
    %520 = vmatpush.msra.mxu0 %v517
    %521 = vmatpush.msra.mxu0 %v516
    %522 = vmatpush.msra.mxu0 %v515
    %523 = vmatpush.msra.mxu0 %v514
    %524 = vmatpush.msra.mxu0 %v513
    %525 = vmatpush.msra.mxu0 %v512
    %526 = vmatpush.msra.mxu0 %v511
    %527 = vmatpush.msra.mxu0 %v510
    %528 = vmatpush.msra.mxu0 %v509
    %529 = vmatpush.msra.mxu0 %v508
    %530 = vmatpush.msra.mxu0 %v507
    %531 = vmatpush.msra.mxu0 %v506
    %532 = vmatpush.msra.mxu0 %v505
    %533 = vmatpush.msra.mxu0 %v504
    %534 = vmatpush.msra.mxu0 %v503
    %535 = vmatmul.f32.gmra.mxu0 %v500
    %v536 = vpop.f32.mrf.mxu0
    %v537 = vadd.f32 0.0, %v536
    %538 = vdwg.mxu0
    %v539 = vadd.f32 %v502, %v537
    %v540 = vtanh.pop %v539
    %541 = vst [vmem:[#allocation2 + $0x38] sm:$0xff] %v540
    %542 = vst [vmem:[%s7] sm:$0xff] %v540
    %v543 = vld [vmem:[#allocation2] sm:$0xff]
    %v544 = vld [vmem:[#allocation2 + $0x8] sm:$0xff]
    %v545 = vld [vmem:[#allocation2 + $0x10] sm:$0xff]
    %v546 = vld [vmem:[#allocation2 + $0x18] sm:$0xff]
    %v547 = vld [vmem:[#allocation2 + $0x20] sm:$0xff]
    %v548 = vld [vmem:[#allocation2 + $0x28] sm:$0xff]
    %v549 = vld [vmem:[#allocation2 + $0x30] sm:$0xff]
    %v550 = vld [vmem:[#allocation2 + $0x38] sm:$0xff]
    %v551 = vld [vmem:[#allocation9] sm:$0xff]
    %v552 = vld [vmem:[#allocation9 + $0x8] sm:$0xff]
    %v553 = vld [vmem:[#allocation9 + $0x10] sm:$0xff]
    %v554 = vld [vmem:[#allocation9 + $0x18] sm:$0xff]
    %v555 = vld [vmem:[#allocation9 + $0x20] sm:$0xff]
    %v556 = vld [vmem:[#allocation9 + $0x28] sm:$0xff]
    %v557 = vld [vmem:[#allocation9 + $0x30] sm:$0xff]
    %v558 = vld [vmem:[#allocation9 + $0x38] sm:$0xff]
    %v559 = vld [vmem:[#allocation9 + $0x40] sm:$0xff]
    %v560 = vld [vmem:[#allocation9 + $0x48] sm:$0xff]
    %v561 = vld [vmem:[#allocation9 + $0x50] sm:$0xff]
    %v562 = vld [vmem:[#allocation9 + $0x58] sm:$0xff]
    %v563 = vld [vmem:[#allocation9 + $0x60] sm:$0xff]
    %v564 = vld [vmem:[#allocation9 + $0x68] sm:$0xff]
    %v565 = vld [vmem:[#allocation9 + $0x70] sm:$0xff]
    %v566 = vld [vmem:[#allocation9 + $0x78] sm:$0xff]
    %v567 = vld [vmem:[%s5] sm:$0x1]
    %v569 = vperm.slane %v567, 0
    %571 = vmatpush.msra.mxu0 %v566
    %572 = vmatpush.msra.mxu0 %v565
    %573 = vmatpush.msra.mxu0 %v564
    %574 = vmatpush.msra.mxu0 %v563
    %575 = vmatpush.msra.mxu0 %v562
    %576 = vmatpush.msra.mxu0 %v561
    %577 = vmatpush.msra.mxu0 %v560
    %578 = vmatpush.msra.mxu0 %v559
    %579 = vmatpush.msra.mxu0 %v558
    %580 = vmatpush.msra.mxu0 %v557
    %581 = vmatpush.msra.mxu0 %v556
    %582 = vmatpush.msra.mxu0 %v555
    %583 = vmatpush.msra.mxu0 %v554
    %584 = vmatpush.msra.mxu0 %v553
    %585 = vmatpush.msra.mxu0 %v552
    %586 = vmatpush.msra.mxu0 %v551
    %587 = vmatmul.f32.gmra.mxu0 %v543
    %v588 = vpop.f32.mrf.mxu0
    %v589 = vadd.f32 %v569, %v588
    %590 = vmatmul.f32.gmra.mxu0 %v544
    %v591 = vpop.f32.mrf.mxu0
    %v592 = vadd.f32 %v569, %v591
    %593 = vmatmul.f32.gmra.mxu0 %v545
    %v594 = vpop.f32.mrf.mxu0
    %v595 = vadd.f32 %v569, %v594
    %596 = vmatmul.f32.gmra.mxu0 %v546
    %v597 = vpop.f32.mrf.mxu0
    %v598 = vadd.f32 %v569, %v597
    %599 = vmatmul.f32.gmra.mxu0 %v547
    %v600 = vpop.f32.mrf.mxu0
    %v601 = vadd.f32 %v569, %v600
    %602 = vmatmul.f32.gmra.mxu0 %v548
    %v603 = vpop.f32.mrf.mxu0
    %v604 = vadd.f32 %v569, %v603
    %605 = vmatmul.f32.gmra.mxu0 %v549
    %v606 = vpop.f32.mrf.mxu0
    %v607 = vadd.f32 %v569, %v606
    %608 = vmatmul.f32.gmra.mxu0 %v550
    %v609 = vpop.f32.mrf.mxu0
    %v610 = vadd.f32 %v569, %v609
    %611 = vdwg.mxu0
    %612 = vst [vmem:[%s6] sm:$0xff] %v589
    %613 = vst [vmem:[%s6 + $0x8] sm:$0xff] %v592
    %614 = vst [vmem:[%s6 + $0x10] sm:$0xff] %v595
    %615 = vst [vmem:[%s6 + $0x18] sm:$0xff] %v598
    %616 = vst [vmem:[%s6 + $0x20] sm:$0xff] %v601
    %617 = vst [vmem:[%s6 + $0x28] sm:$0xff] %v604
    %618 = vst [vmem:[%s6 + $0x30] sm:$0xff] %v607
    %619 = vst [vmem:[%s6 + $0x38] sm:$0xff] %v610
    // Predicated region
    $region42: #{fwd.1} parent=1 // pred_check
      _
    $region43: #{fwd.1} parent=1 // pred_check_branch
      %621 = sbr.rel (0) target = $region45
    $region44: #{fwd.1} parent=1 // pred_region
      _
    $region45: #{fwd.1} parent=1 // pred_fallthru
      _
    // Predicated region
    $region46: #{fwd.1} parent=1 // pred_check
      _
    $region47: #{fwd.1} parent=1 // pred_check_branch
      %623 = sbr.rel (0) target = $region49
    $region48: #{fwd.1} parent=1 // pred_region
      _
    $region49: #{fwd.1} parent=1 // pred_fallthru
      _
    // Predicated region
    $region50: #{fwd.1} parent=1 // pred_check
      _
    $region51: #{fwd.1} parent=1 // pred_check_branch
      %625 = sbr.rel (0) target = $region53
    $region52: #{fwd.1} parent=1 // pred_region
      _
    $region53: #{fwd.1} parent=1 // pred_fallthru
      _
    // Predicated region
    $region54: #{fwd.1} parent=1 // pred_check
      _
    $region55: #{fwd.1} parent=1 // pred_check_branch
      %627 = sbr.rel (0) target = $region57
    $region56: #{fwd.1} parent=1 // pred_region
      _
    $region57: #{fwd.1} parent=1 // pred_fallthru
      _
    %628 = vsyncpa [#allocation4], 1
    %629 = vsyncpa [#allocation8], 1
    %630 = vsyncpa [#allocation5], 1

</llo_original>
